<compile_context>
chip_gen: v5e
topology: v5e:2x2
jax: 0.10.0
libtpu: 0.0.40
codegen_flags: <defaults>
</compile_context>

<pallas_src>
import jax
import jax.numpy as jnp
from jax.experimental import pallas as pl
from jax.experimental.pallas import tpu as pltpu


def _fold_upsample_into_weights(weight_oihw):
    """Fold nearest-2x upsampling into the 3x3 conv weights.

    Returns wp of shape (2, 2, 4*C_in, C_out): for output parity (py, px), a single
    (4*C_in, C_out) matrix whose 4 row-blocks are the 2x2 taps (row offset ro, col
    offset co) applied to the zero-padded ORIGINAL-resolution image.
    """
    c_out, c_in = weight_oihw.shape[0], weight_oihw.shape[1]
    w = jnp.transpose(weight_oihw, (2, 3, 1, 0))           # (ky, kx, C_in, C_out)
    # sel[parity][tap] -> which original 3x3 taps collapse onto this 2x2 tap.
    sel = (((0,), (1, 2)), ((0, 1), (2,)))
    parities = []
    for py in range(2):
        row = []
        for px in range(2):
            blocks = []
            for ro in range(2):
                for co in range(2):
                    acc = jnp.zeros((c_in, c_out), w.dtype)
                    for ky in sel[py][ro]:
                        for kx in sel[px][co]:
                            acc = acc + w[ky, kx]
                    blocks.append(acc)                      # (C_in, C_out)
            row.append(jnp.concatenate(blocks, axis=0))     # (4*C_in, C_out)
        parities.append(jnp.stack(row))
    return jnp.stack(parities)                              # (2, 2, 4*C_in, C_out)


def _upsample_conv_kernel(xm_ref, xh0_ref, xh1_ref, w_ref, b_ref, o_ref):
    """One (batch, row-tile) grid step.

    xm_ref:  (1, TILE_H, W+2, C)   padded-input rows [i*TILE_H, (i+1)*TILE_H)
    xh0_ref: (1, 1, W+2, C)        halo row (i+1)*TILE_H
    xh1_ref: (1, 1, W+2, C)        halo row (i+1)*TILE_H + 1
    w_ref:   (2, 2, 4C, C)         folded per-parity weights (VMEM-resident)
    b_ref:   (1, C)                bias
    o_ref:   (1, 4, TILE_H, W, C)  parity-separated output (axis 1 = py*2 + px)
    """
    tile_h = xm_ref.shape[1]
    w_out = o_ref.shape[3]
    c = o_ref.shape[4]

    # (TILE_H + 2, W + 2, C) working band at ORIGINAL resolution.
    xband = jnp.concatenate([xm_ref[0], xh0_ref[0], xh1_ref[0]], axis=0)
    bias = b_ref[...]                                       # (1, C), broadcasts

    for py in range(2):
        for px in range(2):
            # im2col: 4 shifted taps -> (TILE_H*W, 4C); one MXU matmul with K = 4C.
            taps = []
            for ro in range(2):
                for co in range(2):
                    taps.append(
                        xband[py + ro:py + ro + tile_h,
                              px + co:px + co + w_out, :].reshape(tile_h * w_out, c))
            patches = jnp.concatenate(taps, axis=1)          # (TILE_H*W, 4C)
            acc = jnp.dot(patches, w_ref[py, px],
                          preferred_element_type=jnp.float32)
            acc = acc + bias
            o_ref[0, py * 2 + px, :, :, :] = (
                acc.reshape(tile_h, w_out, c).astype(o_ref.dtype))


def upsample_block(x_nchw, weight_oihw, bias, *, tile_h=None):
    """Equivalent of:  x = F.interpolate(x, scale_factor=2.0); return conv3x3(x)

    x_nchw:      (N, C, H, W)   float32
    weight_oihw: (C, C, 3, 3)   PyTorch Conv2d weight layout
    bias:        (C,)
    returns:     (N, C, 2H, 2W)
    """
    N, C, H, W = x_nchw.shape
    Ho, Wo = 2 * H, 2 * W

    if tile_h is None:
        tile_h = next((t for t in (8, 4, 2, 1) if H % t == 0), H)
    n_rt = H // tile_h

    # NCHW -> NHWC and zero-pad by 1 at ORIGINAL resolution only (~(H+2)(W+2)/(HW)
    # extra bytes, vs. >4x for a materialised upsampled+padded image).
    # TODO(synk): keep the surrounding model NHWC end-to-end to drop this transpose.
    x = jnp.transpose(x_nchw, (0, 2, 3, 1))                  # (N, H, W, C)
    x_pad = jnp.pad(x, ((0, 0), (1, 1), (1, 1), (0, 0)))     # (N, H+2, W+2, C)

    wp = _fold_upsample_into_weights(weight_oihw)            # (2, 2, 4C, C)
    b2 = bias.reshape(1, C)
    # TODO(synk): for MXU-sized channel counts (>=128), cast x_pad/wp to bf16 here
    # (keeping the f32 accumulation in the kernel) for ~2x MXU throughput on v6e/v7x.

    out5 = pl.pallas_call(
        _upsample_conv_kernel,
        out_shape=jax.ShapeDtypeStruct((N, 4, H, W, C), x_nchw.dtype),
        grid_spec=pltpu.PrefetchScalarGridSpec(
            num_scalar_prefetch=0,
            grid=(N, n_rt),
            in_specs=[
                # main band: padded-input rows [i*TILE_H, (i+1)*TILE_H)
                pl.BlockSpec((1, tile_h, W + 2, C), lambda n, i: (n, i, 0, 0)),
                # 2-row bottom halo supplied as two 1-row blocks of the same array
                pl.BlockSpec((1, 1, W + 2, C),
                             lambda n, i: (n, (i + 1) * tile_h, 0, 0)),
                pl.BlockSpec((1, 1, W + 2, C),
                             lambda n, i: (n, (i + 1) * tile_h + 1, 0, 0)),
                # folded weights / bias stay VMEM-resident (constant index_map)
                pl.BlockSpec((2, 2, 4 * C, C), lambda n, i: (0, 0, 0, 0)),
                pl.BlockSpec((1, C), lambda n, i: (0, 0)),
            ],
            out_specs=pl.BlockSpec((1, 4, tile_h, W, C),
                                   lambda n, i: (n, 0, i, 0, 0)),
        ),
        compiler_params=pltpu.CompilerParams(
            dimension_semantics=("parallel", "parallel")),
    )(x_pad, x_pad, x_pad, wp, b2)

    # Interleave parity planes and return NCHW in a single transpose+reshape:
    # (N, py, px, yi, xi, c) -> (N, c, yi, py, xi, px) -> (N, C, 2H, 2W).
    out = jnp.transpose(out5.reshape(N, 2, 2, H, W, C), (0, 5, 3, 1, 4, 2))
    return out.reshape(N, C, Ho, Wo)


def _reference(x_nchw, weight_oihw, bias):
    """Pure-JAX reference (nearest 2x upsample + conv2d) for correctness check."""
    x = jnp.repeat(jnp.repeat(x_nchw, 2, axis=2), 2, axis=3)
    y = jax.lax.conv_general_dilated(
        x, weight_oihw, window_strides=(1, 1), padding=((1, 1), (1, 1)),
        dimension_numbers=("NCHW", "OIHW", "NCHW"))
    return y + bias.reshape(1, -1, 1, 1)


if __name__ == "__main__":
    key = jax.random.PRNGKey(0)
    k_x, k_w, k_b = jax.random.split(key, 3)

    N, C, H, W = 2, 4, 16, 16
    x = jax.random.normal(k_x, (N, C, H, W), dtype=jnp.float32)
    # Deterministic synthetic Conv2d(channels, channels, 3, 1, 1) params.
    weight = jax.random.normal(k_w, (C, C, 3, 3), dtype=jnp.float32) * 0.1
    bias = jax.random.normal(k_b, (C,), dtype=jnp.float32) * 0.1

    out = jax.block_until_ready(upsample_block(x, weight, bias))
    ref = jax.block_until_ready(_reference(x, weight, bias))

    assert out.shape == (N, C, 2 * H, 2 * W), out.shape
    assert jnp.allclose(out, ref, atol=1e-4, rtol=1e-4), "mismatch vs reference"

    print("KERNEL_OK")
</pallas_src>

<mosaic_0001>
module attributes {stable_mosaic.version = 11 : i64} {
  func.func @_upsample_conv_kernel(%arg0: i32, %arg1: i32, %arg2: memref<1x8x18x4xf32, #tpu.memory_space<vmem>>, %arg3: memref<1x1x18x4xf32, #tpu.memory_space<vmem>>, %arg4: memref<1x1x18x4xf32, #tpu.memory_space<vmem>>, %arg5: memref<2x2x16x4xf32, #tpu.memory_space<vmem>>, %arg6: memref<1x4xf32, #tpu.memory_space<vmem>>, %arg7: memref<1x4x8x16x4xf32, #tpu.memory_space<vmem>>) attributes {dimension_semantics = [#tpu.dimension_semantics<parallel>, #tpu.dimension_semantics<parallel>], iteration_bounds = array<i64: 2, 2>, scalar_prefetch = 0 : i64, scratch_operands = 0 : i64, tpu.core_type = #tpu.core_type<tc>, window_params = [{transform_indices = @transform_0, window_bounds = array<i64: 1, 8, 18, 4>}, {transform_indices = @transform_1, window_bounds = array<i64: 1, 1, 18, 4>}, {transform_indices = @transform_2, window_bounds = array<i64: 1, 1, 18, 4>}, {pipeline_mode = #tpu.pipeline_mode<synchronous>, transform_indices = @transform_3, window_bounds = array<i64: 2, 2, 16, 4>}, {pipeline_mode = #tpu.pipeline_mode<synchronous>, transform_indices = @transform_4, window_bounds = array<i64: 1, 4>}, {transform_indices = @transform_5, window_bounds = array<i64: 1, 4, 8, 16, 4>}]} {
    %c0 = arith.constant 0 : index
    %c0_0 = arith.constant 0 : index
    %c0_1 = arith.constant 0 : index
    %c0_2 = arith.constant 0 : index
    %0 = vector.load %arg2[%c0, %c0_0, %c0_1, %c0_2] : memref<1x8x18x4xf32, #tpu.memory_space<vmem>>, vector<1x8x18x4xf32>
    %1 = vector.shape_cast %0 : vector<1x8x18x4xf32> to vector<8x18x4xf32>
    %c0_3 = arith.constant 0 : index
    %c0_4 = arith.constant 0 : index
    %c0_5 = arith.constant 0 : index
    %c0_6 = arith.constant 0 : index
    %2 = vector.load %arg3[%c0_3, %c0_4, %c0_5, %c0_6] : memref<1x1x18x4xf32, #tpu.memory_space<vmem>>, vector<1x1x18x4xf32>
    %3 = vector.shape_cast %2 : vector<1x1x18x4xf32> to vector<1x18x4xf32>
    %c0_7 = arith.constant 0 : index
    %c0_8 = arith.constant 0 : index
    %c0_9 = arith.constant 0 : index
    %c0_10 = arith.constant 0 : index
    %4 = vector.load %arg4[%c0_7, %c0_8, %c0_9, %c0_10] : memref<1x1x18x4xf32, #tpu.memory_space<vmem>>, vector<1x1x18x4xf32>
    %5 = vector.shape_cast %4 : vector<1x1x18x4xf32> to vector<1x18x4xf32>
    %6 = tpu.concatenate %1, %3, %5 in 0 : vector<8x18x4xf32>, vector<1x18x4xf32>, vector<1x18x4xf32> -> vector<10x18x4xf32>
    %c0_11 = arith.constant 0 : index
    %c0_12 = arith.constant 0 : index
    %7 = vector.load %arg6[%c0_11, %c0_12] : memref<1x4xf32, #tpu.memory_space<vmem>>, vector<1x4xf32>
    %8 = vector.extract_strided_slice %6 {offsets = [0, 0, 0], sizes = [8, 16, 4], strides = [1, 1, 1]} : vector<10x18x4xf32> to vector<8x16x4xf32>
    %9 = vector.shape_cast %8 : vector<8x16x4xf32> to vector<128x4xf32>
    %10 = vector.extract_strided_slice %6 {offsets = [0, 1, 0], sizes = [8, 16, 4], strides = [1, 1, 1]} : vector<10x18x4xf32> to vector<8x16x4xf32>
    %11 = vector.shape_cast %10 : vector<8x16x4xf32> to vector<128x4xf32>
    %12 = vector.extract_strided_slice %6 {offsets = [1, 0, 0], sizes = [8, 16, 4], strides = [1, 1, 1]} : vector<10x18x4xf32> to vector<8x16x4xf32>
    %13 = vector.shape_cast %12 : vector<8x16x4xf32> to vector<128x4xf32>
    %14 = vector.extract_strided_slice %6 {offsets = [1, 1, 0], sizes = [8, 16, 4], strides = [1, 1, 1]} : vector<10x18x4xf32> to vector<8x16x4xf32>
    %15 = vector.shape_cast %14 : vector<8x16x4xf32> to vector<128x4xf32>
    %16 = tpu.concatenate %9, %11, %13, %15 in 1 : vector<128x4xf32>, vector<128x4xf32>, vector<128x4xf32>, vector<128x4xf32> -> vector<128x16xf32>
    %c0_13 = arith.constant 0 : index
    %c0_14 = arith.constant 0 : index
    %c0_15 = arith.constant 0 : index
    %c0_16 = arith.constant 0 : index
    %17 = vector.load %arg5[%c0_13, %c0_14, %c0_15, %c0_16] : memref<2x2x16x4xf32, #tpu.memory_space<vmem>>, vector<1x1x16x4xf32>
    %18 = vector.shape_cast %17 : vector<1x1x16x4xf32> to vector<16x4xf32>
    %cst = arith.constant dense<0.000000e+00> : vector<128x4xf32>
    %19 = tpu.matmul %16, %18, %cst {dimension_numbers = #tpu.dot_dimension_numbers<[1], [0], [0], [1], [0, 0, 1, 1], [], []>} : vector<128x16xf32>, vector<16x4xf32>, vector<128x4xf32> -> vector<128x4xf32>
    %20 = vector.broadcast %7 : vector<1x4xf32> to vector<128x4xf32>
    %21 = arith.addf %19, %20 : vector<128x4xf32>
    %22 = vector.shape_cast %21 : vector<128x4xf32> to vector<8x16x4xf32>
    %c0_17 = arith.constant 0 : index
    %c0_18 = arith.constant 0 : index
    %c0_19 = arith.constant 0 : index
    %c0_20 = arith.constant 0 : index
    %c0_21 = arith.constant 0 : index
    %23 = vector.load %arg7[%c0_17, %c0_18, %c0_19, %c0_20, %c0_21] : memref<1x4x8x16x4xf32, #tpu.memory_space<vmem>>, vector<1x1x8x16x4xf32>
    %24 = vector.shape_cast %23 : vector<1x1x8x16x4xf32> to vector<8x16x4xf32>
    %25 = vector.shape_cast %22 : vector<8x16x4xf32> to vector<1x1x8x16x4xf32>
    tpu.vector_store %arg7[%c0_17, %c0_18, %c0_19, %c0_20, %c0_21], %25 {strides = array<i32>} : memref<1x4x8x16x4xf32, #tpu.memory_space<vmem>>, vector<1x1x8x16x4xf32>,
    %26 = vector.extract_strided_slice %6 {offsets = [0, 1, 0], sizes = [8, 16, 4], strides = [1, 1, 1]} : vector<10x18x4xf32> to vector<8x16x4xf32>
    %27 = vector.shape_cast %26 : vector<8x16x4xf32> to vector<128x4xf32>
    %28 = vector.extract_strided_slice %6 {offsets = [0, 2, 0], sizes = [8, 16, 4], strides = [1, 1, 1]} : vector<10x18x4xf32> to vector<8x16x4xf32>
    %29 = vector.shape_cast %28 : vector<8x16x4xf32> to vector<128x4xf32>
    %30 = vector.extract_strided_slice %6 {offsets = [1, 1, 0], sizes = [8, 16, 4], strides = [1, 1, 1]} : vector<10x18x4xf32> to vector<8x16x4xf32>
    %31 = vector.shape_cast %30 : vector<8x16x4xf32> to vector<128x4xf32>
    %32 = vector.extract_strided_slice %6 {offsets = [1, 2, 0], sizes = [8, 16, 4], strides = [1, 1, 1]} : vector<10x18x4xf32> to vector<8x16x4xf32>
    %33 = vector.shape_cast %32 : vector<8x16x4xf32> to vector<128x4xf32>
    %34 = tpu.concatenate %27, %29, %31, %33 in 1 : vector<128x4xf32>, vector<128x4xf32>, vector<128x4xf32>, vector<128x4xf32> -> vector<128x16xf32>
    %c0_22 = arith.constant 0 : index
    %c1 = arith.constant 1 : index
    %c0_23 = arith.constant 0 : index
    %c0_24 = arith.constant 0 : index
    %35 = vector.load %arg5[%c0_22, %c1, %c0_23, %c0_24] : memref<2x2x16x4xf32, #tpu.memory_space<vmem>>, vector<1x1x16x4xf32>
    %36 = vector.shape_cast %35 : vector<1x1x16x4xf32> to vector<16x4xf32>
    %cst_25 = arith.constant dense<0.000000e+00> : vector<128x4xf32>
    %37 = tpu.matmul %34, %36, %cst_25 {dimension_numbers = #tpu.dot_dimension_numbers<[1], [0], [0], [1], [0, 0, 1, 1], [], []>} : vector<128x16xf32>, vector<16x4xf32>, vector<128x4xf32> -> vector<128x4xf32>
    %38 = vector.broadcast %7 : vector<1x4xf32> to vector<128x4xf32>
    %39 = arith.addf %37, %38 : vector<128x4xf32>
    %40 = vector.shape_cast %39 : vector<128x4xf32> to vector<8x16x4xf32>
    %c0_26 = arith.constant 0 : index
    %c1_27 = arith.constant 1 : index
    %c0_28 = arith.constant 0 : index
    %c0_29 = arith.constant 0 : index
    %c0_30 = arith.constant 0 : index
    %41 = vector.load %arg7[%c0_26, %c1_27, %c0_28, %c0_29, %c0_30] : memref<1x4x8x16x4xf32, #tpu.memory_space<vmem>>, vector<1x1x8x16x4xf32>
    %42 = vector.shape_cast %41 : vector<1x1x8x16x4xf32> to vector<8x16x4xf32>
    %43 = vector.shape_cast %40 : vector<8x16x4xf32> to vector<1x1x8x16x4xf32>
    tpu.vector_store %arg7[%c0_26, %c1_27, %c0_28, %c0_29, %c0_30], %43 {strides = array<i32>} : memref<1x4x8x16x4xf32, #tpu.memory_space<vmem>>, vector<1x1x8x16x4xf32>,
    %44 = vector.extract_strided_slice %6 {offsets = [1, 0, 0], sizes = [8, 16, 4], strides = [1, 1, 1]} : vector<10x18x4xf32> to vector<8x16x4xf32>
    %45 = vector.shape_cast %44 : vector<8x16x4xf32> to vector<128x4xf32>
    %46 = vector.extract_strided_slice %6 {offsets = [1, 1, 0], sizes = [8, 16, 4], strides = [1, 1, 1]} : vector<10x18x4xf32> to vector<8x16x4xf32>
    %47 = vector.shape_cast %46 : vector<8x16x4xf32> to vector<128x4xf32>
    %48 = vector.extract_strided_slice %6 {offsets = [2, 0, 0], sizes = [8, 16, 4], strides = [1, 1, 1]} : vector<10x18x4xf32> to vector<8x16x4xf32>
    %49 = vector.shape_cast %48 : vector<8x16x4xf32> to vector<128x4xf32>
    %50 = vector.extract_strided_slice %6 {offsets = [2, 1, 0], sizes = [8, 16, 4], strides = [1, 1, 1]} : vector<10x18x4xf32> to vector<8x16x4xf32>
    %51 = vector.shape_cast %50 : vector<8x16x4xf32> to vector<128x4xf32>
    %52 = tpu.concatenate %45, %47, %49, %51 in 1 : vector<128x4xf32>, vector<128x4xf32>, vector<128x4xf32>, vector<128x4xf32> -> vector<128x16xf32>
    %c1_31 = arith.constant 1 : index
    %c0_32 = arith.constant 0 : index
    %c0_33 = arith.constant 0 : index
    %c0_34 = arith.constant 0 : index
    %53 = vector.load %arg5[%c1_31, %c0_32, %c0_33, %c0_34] : memref<2x2x16x4xf32, #tpu.memory_space<vmem>>, vector<1x1x16x4xf32>
    %54 = vector.shape_cast %53 : vector<1x1x16x4xf32> to vector<16x4xf32>
    %cst_35 = arith.constant dense<0.000000e+00> : vector<128x4xf32>
    %55 = tpu.matmul %52, %54, %cst_35 {dimension_numbers = #tpu.dot_dimension_numbers<[1], [0], [0], [1], [0, 0, 1, 1], [], []>} : vector<128x16xf32>, vector<16x4xf32>, vector<128x4xf32> -> vector<128x4xf32>
    %56 = vector.broadcast %7 : vector<1x4xf32> to vector<128x4xf32>
    %57 = arith.addf %55, %56 : vector<128x4xf32>
    %58 = vector.shape_cast %57 : vector<128x4xf32> to vector<8x16x4xf32>
    %c0_36 = arith.constant 0 : index
    %c2 = arith.constant 2 : index
    %c0_37 = arith.constant 0 : index
    %c0_38 = arith.constant 0 : index
    %c0_39 = arith.constant 0 : index
    %59 = vector.load %arg7[%c0_36, %c2, %c0_37, %c0_38, %c0_39] : memref<1x4x8x16x4xf32, #tpu.memory_space<vmem>>, vector<1x1x8x16x4xf32>
    %60 = vector.shape_cast %59 : vector<1x1x8x16x4xf32> to vector<8x16x4xf32>
    %61 = vector.shape_cast %58 : vector<8x16x4xf32> to vector<1x1x8x16x4xf32>
    tpu.vector_store %arg7[%c0_36, %c2, %c0_37, %c0_38, %c0_39], %61 {strides = array<i32>} : memref<1x4x8x16x4xf32, #tpu.memory_space<vmem>>, vector<1x1x8x16x4xf32>,
    %62 = vector.extract_strided_slice %6 {offsets = [1, 1, 0], sizes = [8, 16, 4], strides = [1, 1, 1]} : vector<10x18x4xf32> to vector<8x16x4xf32>
    %63 = vector.shape_cast %62 : vector<8x16x4xf32> to vector<128x4xf32>
    %64 = vector.extract_strided_slice %6 {offsets = [1, 2, 0], sizes = [8, 16, 4], strides = [1, 1, 1]} : vector<10x18x4xf32> to vector<8x16x4xf32>
    %65 = vector.shape_cast %64 : vector<8x16x4xf32> to vector<128x4xf32>
    %66 = vector.extract_strided_slice %6 {offsets = [2, 1, 0], sizes = [8, 16, 4], strides = [1, 1, 1]} : vector<10x18x4xf32> to vector<8x16x4xf32>
    %67 = vector.shape_cast %66 : vector<8x16x4xf32> to vector<128x4xf32>
    %68 = vector.extract_strided_slice %6 {offsets = [2, 2, 0], sizes = [8, 16, 4], strides = [1, 1, 1]} : vector<10x18x4xf32> to vector<8x16x4xf32>
    %69 = vector.shape_cast %68 : vector<8x16x4xf32> to vector<128x4xf32>
    %70 = tpu.concatenate %63, %65, %67, %69 in 1 : vector<128x4xf32>, vector<128x4xf32>, vector<128x4xf32>, vector<128x4xf32> -> vector<128x16xf32>
    %c1_40 = arith.constant 1 : index
    %c1_41 = arith.constant 1 : index
    %c0_42 = arith.constant 0 : index
    %c0_43 = arith.constant 0 : index
    %71 = vector.load %arg5[%c1_40, %c1_41, %c0_42, %c0_43] : memref<2x2x16x4xf32, #tpu.memory_space<vmem>>, vector<1x1x16x4xf32>
    %72 = vector.shape_cast %71 : vector<1x1x16x4xf32> to vector<16x4xf32>
    %cst_44 = arith.constant dense<0.000000e+00> : vector<128x4xf32>
    %73 = tpu.matmul %70, %72, %cst_44 {dimension_numbers = #tpu.dot_dimension_numbers<[1], [0], [0], [1], [0, 0, 1, 1], [], []>} : vector<128x16xf32>, vector<16x4xf32>, vector<128x4xf32> -> vector<128x4xf32>
    %74 = vector.broadcast %7 : vector<1x4xf32> to vector<128x4xf32>
    %75 = arith.addf %73, %74 : vector<128x4xf32>
    %76 = vector.shape_cast %75 : vector<128x4xf32> to vector<8x16x4xf32>
    %c0_45 = arith.constant 0 : index
    %c3 = arith.constant 3 : index
    %c0_46 = arith.constant 0 : index
    %c0_47 = arith.constant 0 : index
    %c0_48 = arith.constant 0 : index
    %77 = vector.load %arg7[%c0_45, %c3, %c0_46, %c0_47, %c0_48] : memref<1x4x8x16x4xf32, #tpu.memory_space<vmem>>, vector<1x1x8x16x4xf32>
    %78 = vector.shape_cast %77 : vector<1x1x8x16x4xf32> to vector<8x16x4xf32>
    %79 = vector.shape_cast %76 : vector<8x16x4xf32> to vector<1x1x8x16x4xf32>
    tpu.vector_store %arg7[%c0_45, %c3, %c0_46, %c0_47, %c0_48], %79 {strides = array<i32>} : memref<1x4x8x16x4xf32, #tpu.memory_space<vmem>>, vector<1x1x8x16x4xf32>,
    return
  }
  func.func @transform_0(%arg0: i32, %arg1: i32) -> (i32, i32, i32, i32) {
    %c0_i32 = arith.constant 0 : i32
    %c0_i32_0 = arith.constant 0 : i32
    %c0_i32_1 = arith.constant 0 : i32
    return %arg0, %arg1, %c0_i32, %c0_i32_0 : i32, i32, i32, i32
  }
  func.func @transform_1(%arg0: i32, %arg1: i32) -> (i32, i32, i32, i32) {
    %c1_i32 = arith.constant 1 : i32
    %0 = arith.addi %arg1, %c1_i32 : i32
    %c8_i32 = arith.constant 8 : i32
    %1 = arith.muli %0, %c8_i32 : i32
    %c0_i32 = arith.constant 0 : i32
    %c0_i32_0 = arith.constant 0 : i32
    %c0_i32_1 = arith.constant 0 : i32
    return %arg0, %1, %c0_i32, %c0_i32_0 : i32, i32, i32, i32
  }
  func.func @transform_2(%arg0: i32, %arg1: i32) -> (i32, i32, i32, i32) {
    %c1_i32 = arith.constant 1 : i32
    %0 = arith.addi %arg1, %c1_i32 : i32
    %c8_i32 = arith.constant 8 : i32
    %1 = arith.muli %0, %c8_i32 : i32
    %c1_i32_0 = arith.constant 1 : i32
    %2 = arith.addi %1, %c1_i32_0 : i32
    %c0_i32 = arith.constant 0 : i32
    %c0_i32_1 = arith.constant 0 : i32
    %c0_i32_2 = arith.constant 0 : i32
    return %arg0, %2, %c0_i32, %c0_i32_1 : i32, i32, i32, i32
  }
  func.func @transform_3(%arg0: i32, %arg1: i32) -> (i32, i32, i32, i32) {
    %c0_i32 = arith.constant 0 : i32
    %c0_i32_0 = arith.constant 0 : i32
    %c0_i32_1 = arith.constant 0 : i32
    %c0_i32_2 = arith.constant 0 : i32
    %c0_i32_3 = arith.constant 0 : i32
    return %c0_i32, %c0_i32_0, %c0_i32_1, %c0_i32_2 : i32, i32, i32, i32
  }
  func.func @transform_4(%arg0: i32, %arg1: i32) -> (i32, i32) {
    %c0_i32 = arith.constant 0 : i32
    %c0_i32_0 = arith.constant 0 : i32
    %c0_i32_1 = arith.constant 0 : i32
    return %c0_i32, %c0_i32_0 : i32, i32
  }
  func.func @transform_5(%arg0: i32, %arg1: i32) -> (i32, i32, i32, i32, i32) {
    %c0_i32 = arith.constant 0 : i32
    %c0_i32_0 = arith.constant 0 : i32
    %c0_i32_1 = arith.constant 0 : i32
    %c0_i32_2 = arith.constant 0 : i32
    return %arg0, %c0_i32, %arg1, %c0_i32_0, %c0_i32_1 : i32, i32, i32, i32, i32
  }
}

</mosaic_0001>

<llo_original>
// kernel: tpu_custom_call.1
$region0: #{tpu_custom_call.1}
  #allocation0 [shape = 'u32[]', space=smem, size = 0x4, offset = 0x4, fixed_abs, tag = 'smem constant byte address 0x4 - core index']
  #allocation1 [shape = 'u32[72,128]{1,0:T(1,128)}', space=vmem, size = 0x9000, scoped, tag = 'internal scratch']
  %s0 = inlined_call_operand.vmem [shape: f32[2,18,18,4], index: 0, kind: input, shape index: {}]
  %s1 = inlined_call_operand.vmem [shape: f32[2,18,18,4], index: 1, kind: input, shape index: {}]
  %s2 = inlined_call_operand.vmem [shape: f32[2,18,18,4], index: 2, kind: input, shape index: {}]
  %s3 = inlined_call_operand.vmem [shape: f32[2,2,16,4], index: 3, kind: input, shape index: {}]
  %s4 = inlined_call_operand.vmem [shape: f32[1,4], index: 4, kind: input, shape index: {}]
  %s5 = inlined_call_operand.vmem [shape: f32[2,4,16,16,4], index: 5, kind: output, shape index: {}]
  %s6 = sld [smem:[#allocation0]]
  $region87: #{tpu_custom_call.1} parent=0
    _
  %s8 = ssub.s32 1, %s6
  %s9 = scalar_select 0, %s8, %s6
  $region1: #{tpu_custom_call.1} parent=0
    #allocation2 [shape = 'u8[524288]{0}', space=vmem, size = 0x80000, scoped, tag = 'output window, operand 0']
    loop: start=0, step=1, limit=6
    $region2: #{tpu_custom_call.1} parent=1 // loop_pre_header
      _
    $region3: #{tpu_custom_call.1} parent=1 // loop_header
      %s11 = sphi 0, %s15
      %p12 = scmp.ge.s32.totalorder %s11, 6
      %s18 = sphi 0, %s30
      %s19 = sphi 0, %s26
      %s20 = sphi 0, %s18
      %s21 = sphi 0, %s19
      %s22 = sphi 0, %s20
      %s23 = sphi 0, %s21
      %s35 = sphi 0, %s37
      %s38 = sphi 0, %s35
      %s39 = sphi 0, %s38
      %s55 = sphi 0, %s39
      %s67 = sphi 0, %s69
      %s70 = sphi 0, %s67
      %s71 = sphi 0, %s70
      %s87 = sphi 0, %s71
      %s101 = sphi 0, %s103
      %s104 = sphi 0, %s101
      %s105 = sphi 0, %s104
      %s121 = sphi 0, %s105
      %s125 = sphi 0, %s125
      %s127 = sphi 0, %s125
      %s128 = sphi 0, %s127
      %s142 = sphi 0, %s128
      %s146 = sphi 0, %s146
      %s148 = sphi 0, %s146
      %s149 = sphi 0, %s148
      %s163 = sphi 0, %s149
      %s171 = sphi 0, %s173
      %s174 = sphi 0, %s171
      %s175 = sphi 0, %s174
      %s191 = sphi 0, %s175
    $region4: #{tpu_custom_call.1} parent=1 // loop_header_branch
      %14 = sbr.rel (%p12) target = $region8
    $region5: #{tpu_custom_call.1} parent=1 // loop_body
      %s16 = ssub.s32 %s11, 1
      %s17 = ssub.s32 %s11, 2
      %s24 = sadd.s32 1, %s19
      %p25 = scmp.ge.s32.totalorder %s24, 2
      %s26 = scalar_select %p25, 0, %s24
      %s27 = sadd.s32 1, %s18
      %s28 = scalar_select %p25, %s27, %s18
      %p29 = scmp.ge.s32.totalorder %s28, 2
      %s30 = scalar_select %p29, 0, %s28
      %s31 = ssub.s32 %s18, %s30
      %s32 = ssub.s32 %s19, %s26
      %s33 = sor.u32 %s31, %s32
      %p34 = scmp.eq.s32.totalorder %s33, 0
      %s36 = sadd.s32 %s35, 1
      %s37 = scalar_select %p34, %s35, %s36
      %p40 = pneg %p34
      %p41 = scmp.eq.s32.totalorder %s11, 3
      %p42 = por %p40, %p41
      %p43 = scmp.ne.s32.totalorder %s35, %s38
      %p44 = scmp.eq.s32.totalorder %s11, 0
      %p45 = por %p43, %p44
      %p46 = scmp.ne.s32.totalorder %s35, %s38
      %p47 = scmp.eq.s32.totalorder %s16, 3
      %p48 = por %p46, %p47
      %p49 = scmp.ne.s32.totalorder %s38, %s39
      %p50 = scmp.eq.s32.totalorder %s16, 0
      %p51 = por %p49, %p50
      %p52 = scmp.ne.s32.totalorder %s38, %s39
      %p53 = scmp.eq.s32.totalorder %s17, 3
      %p54 = por %p52, %p53
      %p56 = scmp.ne.s32.totalorder %s39, %s55
      %p57 = scmp.eq.s32.totalorder %s17, 0
      %p58 = por %p56, %p57
      %s59 = sadd.s32 %s19, 1
      %s60 = smul.u32 %s59, 8
      %s61 = sadd.s32 %s26, 1
      %s62 = smul.u32 %s61, 8
      %s63 = ssub.s32 %s18, %s30
      %s64 = ssub.s32 %s60, %s62
      %s65 = sor.u32 %s63, %s64
      %p66 = scmp.eq.s32.totalorder %s65, 0
      %s68 = sadd.s32 %s67, 1
      %s69 = scalar_select %p66, %s67, %s68
      %p72 = pneg %p66
      %p73 = scmp.eq.s32.totalorder %s11, 3
      %p74 = por %p72, %p73
      %p75 = scmp.ne.s32.totalorder %s67, %s70
      %p76 = scmp.eq.s32.totalorder %s11, 0
      %p77 = por %p75, %p76
      %p78 = scmp.ne.s32.totalorder %s67, %s70
      %p79 = scmp.eq.s32.totalorder %s16, 3
      %p80 = por %p78, %p79
      %p81 = scmp.ne.s32.totalorder %s70, %s71
      %p82 = scmp.eq.s32.totalorder %s16, 0
      %p83 = por %p81, %p82
      %p84 = scmp.ne.s32.totalorder %s70, %s71
      %p85 = scmp.eq.s32.totalorder %s17, 3
      %p86 = por %p84, %p85
      %p88 = scmp.ne.s32.totalorder %s71, %s87
      %p89 = scmp.eq.s32.totalorder %s17, 0
      %p90 = por %p88, %p89
      %s91 = sadd.s32 %s19, 1
      %s92 = smul.u32 %s91, 8
      %s93 = sadd.s32 %s92, 1
      %s94 = sadd.s32 %s26, 1
      %s95 = smul.u32 %s94, 8
      %s96 = sadd.s32 %s95, 1
      %s97 = ssub.s32 %s18, %s30
      %s98 = ssub.s32 %s93, %s96
      %s99 = sor.u32 %s97, %s98
      %p100 = scmp.eq.s32.totalorder %s99, 0
      %s102 = sadd.s32 %s101, 1
      %s103 = scalar_select %p100, %s101, %s102
      %p106 = pneg %p100
      %p107 = scmp.eq.s32.totalorder %s11, 3
      %p108 = por %p106, %p107
      %p109 = scmp.ne.s32.totalorder %s101, %s104
      %p110 = scmp.eq.s32.totalorder %s11, 0
      %p111 = por %p109, %p110
      %p112 = scmp.ne.s32.totalorder %s101, %s104
      %p113 = scmp.eq.s32.totalorder %s16, 3
      %p114 = por %p112, %p113
      %p115 = scmp.ne.s32.totalorder %s104, %s105
      %p116 = scmp.eq.s32.totalorder %s16, 0
      %p117 = por %p115, %p116
      %p118 = scmp.ne.s32.totalorder %s104, %s105
      %p119 = scmp.eq.s32.totalorder %s17, 3
      %p120 = por %p118, %p119
      %p122 = scmp.ne.s32.totalorder %s105, %s121
      %p123 = scmp.eq.s32.totalorder %s17, 0
      %p124 = por %p122, %p123
      %s126 = sadd.s32 %s125, 1
      %p129 = scmp.eq.s32.totalorder %s11, 3
      %p130 = scmp.ne.s32.totalorder %s125, %s127
      %p131 = scmp.eq.s32.totalorder %s11, 0
      %p132 = por %p130, %p131
      %p133 = scmp.ne.s32.totalorder %s125, %s127
      %p134 = scmp.eq.s32.totalorder %s16, 3
      %p135 = por %p133, %p134
      %p136 = scmp.ne.s32.totalorder %s127, %s128
      %p137 = scmp.eq.s32.totalorder %s16, 0
      %p138 = por %p136, %p137
      %p139 = scmp.ne.s32.totalorder %s127, %s128
      %p140 = scmp.eq.s32.totalorder %s17, 3
      %p141 = por %p139, %p140
      %p143 = scmp.ne.s32.totalorder %s128, %s142
      %p144 = scmp.eq.s32.totalorder %s17, 0
      %p145 = por %p143, %p144
      %s147 = sadd.s32 %s146, 1
      %p150 = scmp.eq.s32.totalorder %s11, 3
      %p151 = scmp.ne.s32.totalorder %s146, %s148
      %p152 = scmp.eq.s32.totalorder %s11, 0
      %p153 = por %p151, %p152
      %p154 = scmp.ne.s32.totalorder %s146, %s148
      %p155 = scmp.eq.s32.totalorder %s16, 3
      %p156 = por %p154, %p155
      %p157 = scmp.ne.s32.totalorder %s148, %s149
      %p158 = scmp.eq.s32.totalorder %s16, 0
      %p159 = por %p157, %p158
      %p160 = scmp.ne.s32.totalorder %s148, %s149
      %p161 = scmp.eq.s32.totalorder %s17, 3
      %p162 = por %p160, %p161
      %p164 = scmp.ne.s32.totalorder %s149, %s163
      %p165 = scmp.eq.s32.totalorder %s17, 0
      %p166 = por %p164, %p165
      %s167 = ssub.s32 %s18, %s30
      %s168 = ssub.s32 %s19, %s26
      %s169 = sor.u32 %s167, %s168
      %p170 = scmp.eq.s32.totalorder %s169, 0
      %s172 = sadd.s32 %s171, 1
      %s173 = scalar_select %p170, %s171, %s172
      %p176 = pneg %p170
      %p177 = scmp.eq.s32.totalorder %s11, 3
      %p178 = por %p176, %p177
      %p179 = scmp.ne.s32.totalorder %s171, %s174
      %p180 = scmp.eq.s32.totalorder %s11, 0
      %p181 = por %p179, %p180
      %p182 = scmp.ne.s32.totalorder %s171, %s174
      %p183 = scmp.eq.s32.totalorder %s16, 3
      %p184 = por %p182, %p183
      %p185 = scmp.ne.s32.totalorder %s174, %s175
      %p186 = scmp.eq.s32.totalorder %s16, 0
      %p187 = por %p185, %p186
      %p188 = scmp.ne.s32.totalorder %s174, %s175
      %p189 = scmp.eq.s32.totalorder %s17, 3
      %p190 = por %p188, %p189
      %p192 = scmp.ne.s32.totalorder %s175, %s191
      %p193 = scmp.eq.s32.totalorder %s17, 0
      %p194 = por %p192, %p193
      %p195 = scmp.le.s32.totalorder 1, %s11
      %p196 = scmp.lt.s32.totalorder %s11, 5
      %p197 = pnand %p195, %p196
      %p198 = pneg %p197
      // Predicated region
      $region9: #{tpu_custom_call.1} parent=5 // pred_check
        _
      $region10: #{tpu_custom_call.1} parent=5 // pred_check_branch
        %200 = sbr.rel (%p197) target = $region12
      $region11: #{tpu_custom_call.1} parent=5 // pred_region
        %s201 = ssub.s32 %s11, 1
        // Predicated region
        $region13: #{tpu_custom_call.1} parent=11 // pred_check
          %p202 = pneg %p138
        $region14: #{tpu_custom_call.1} parent=11 // pred_check_branch
          %204 = sbr.rel (%p202) target = $region16
        $region15: #{tpu_custom_call.1} parent=11 // pred_region
          _
        $region16: #{tpu_custom_call.1} parent=11 // pred_fallthru
          _
        // Predicated region
        $region17: #{tpu_custom_call.1} parent=11 // pred_check
          %p205 = pneg %p159
        $region18: #{tpu_custom_call.1} parent=11 // pred_check_branch
          %207 = sbr.rel (%p205) target = $region20
        $region19: #{tpu_custom_call.1} parent=11 // pred_region
          _
        $region20: #{tpu_custom_call.1} parent=11 // pred_fallthru
          _
      $region12: #{tpu_custom_call.1} parent=5 // pred_fallthru
        _
      %p208 = scmp.lt.s32.totalorder %s11, 4
      // Predicated region
      $region21: #{tpu_custom_call.1} parent=5 // pred_check
        %p209 = pneg %p208
      $region22: #{tpu_custom_call.1} parent=5 // pred_check_branch
        %211 = sbr.rel (%p209) target = $region24
      $region23: #{tpu_custom_call.1} parent=5 // pred_region
        // Predicated region
        $region25: #{tpu_custom_call.1} parent=23 // pred_check
          %p212 = pneg %p45
        $region26: #{tpu_custom_call.1} parent=23 // pred_check_branch
          %214 = sbr.rel (%p212) target = $region28
        $region27: #{tpu_custom_call.1} parent=23 // pred_region
          %s215 = smul.u32 8, %s19
          %s216 = ssub.s32 18, %s215
          %p217 = scmp.lt.s32.totalorder %s216, 8
          %s218 = scalar_select %p217, %s216, 8
          %s219 = smul.u32 8, %s218
          %s220 = smul.u32 %s219, 3
          %p221 = scmp.lt.s32.totalorder %s18, 1
          %s222 = scalar_select %p221, %s18, 1
          %p223 = scmp.lt.s32.totalorder %s215, 17
          %s224 = scalar_select %p223, %s215, 17
          %s225 = smul.addr %s224, 3
          %s226 = smul.addr %s222, 54
          %s227 = sadd.s32 %s225, %s226
          %s228 = smul.addr %s227, 8
          %s229 = scalar_lea.vmem %s0, %s228
          %s230 = smul.u32 8, %s19
          %s231 = ssub.s32 18, %s230
          %p232 = scmp.lt.s32.totalorder %s231, 8
          %s233 = scalar_select %p232, %s231, 8
          %s234 = smul.u32 8, %s233
          %s235 = smul.u32 %s234, 3
        $region28: #{tpu_custom_call.1} parent=23 // pred_fallthru
          _
        // Predicated region
        $region29: #{tpu_custom_call.1} parent=23 // pred_check
          %p236 = pneg %p77
        $region30: #{tpu_custom_call.1} parent=23 // pred_check_branch
          %238 = sbr.rel (%p236) target = $region32
        $region31: #{tpu_custom_call.1} parent=23 // pred_region
          %s239 = sadd.s32 %s19, 1
          %s240 = smul.u32 %s239, 8
          %p241 = scmp.lt.s32.totalorder %s18, 1
          %s242 = scalar_select %p241, %s18, 1
          %p243 = scmp.lt.s32.totalorder %s240, 17
          %s244 = scalar_select %p243, %s240, 17
          %s245 = smul.addr %s244, 3
          %s246 = smul.addr %s242, 54
          %s247 = sadd.s32 %s245, %s246
          %s248 = smul.addr %s247, 8
          %s249 = scalar_lea.vmem %s1, %s248
          %s250 = sadd.s32 %s19, 1
          %s251 = smul.u32 %s250, 8
        $region32: #{tpu_custom_call.1} parent=23 // pred_fallthru
          _
        // Predicated region
        $region33: #{tpu_custom_call.1} parent=23 // pred_check
          %p252 = pneg %p111
        $region34: #{tpu_custom_call.1} parent=23 // pred_check_branch
          %254 = sbr.rel (%p252) target = $region36
        $region35: #{tpu_custom_call.1} parent=23 // pred_region
          %s255 = sadd.s32 %s19, 1
          %s256 = smul.u32 %s255, 8
          %s257 = sadd.s32 %s256, 1
          %p258 = scmp.lt.s32.totalorder %s18, 1
          %s259 = scalar_select %p258, %s18, 1
          %p260 = scmp.lt.s32.totalorder %s257, 17
          %s261 = scalar_select %p260, %s257, 17
          %s262 = smul.addr %s261, 3
          %s263 = smul.addr %s259, 54
          %s264 = sadd.s32 %s262, %s263
          %s265 = smul.addr %s264, 8
          %s266 = scalar_lea.vmem %s2, %s265
          %s267 = sadd.s32 %s19, 1
          %s268 = smul.u32 %s267, 8
          %s269 = sadd.s32 %s268, 1
        $region36: #{tpu_custom_call.1} parent=23 // pred_fallthru
          _
      $region24: #{tpu_custom_call.1} parent=5 // pred_fallthru
        _
      %p270 = scmp.le.s32.totalorder 1, %s11
      %p271 = scmp.lt.s32.totalorder %s11, 5
      %p272 = pnand %p270, %p271
      %p273 = pneg %p272
      // Predicated region
      $region37: #{tpu_custom_call.1} parent=5 // pred_check
        _
      $region38: #{tpu_custom_call.1} parent=5 // pred_check_branch
        %275 = sbr.rel (%p272) target = $region40
      $region39: #{tpu_custom_call.1} parent=5 // pred_region
        %s276 = ssub.s32 %s11, 1
        %s277 = smul.u32 8, %s21
        %s278 = ssub.s32 18, %s277
        %p279 = scmp.lt.s32.totalorder %s278, 8
        %s280 = scalar_select %p279, %s278, 8
        %s281 = smul.u32 8, %s280
        %s282 = smul.u32 %s281, 3
        %p283 = scmp.lt.s32.totalorder %s20, 1
        %s284 = scalar_select %p283, %s20, 1
        %p285 = scmp.lt.s32.totalorder %s277, 17
        %s286 = scalar_select %p285, %s277, 17
        %s287 = smul.addr %s286, 3
        %s288 = smul.addr %s284, 54
        %s289 = sadd.s32 %s287, %s288
        %s290 = smul.addr %s289, 8
        %s291 = scalar_lea.vmem %s0, %s290
        %p292 = pneg %p51
        %p293 = pneg %p48
        %s294 = sadd.s32 %s21, 1
        %s295 = smul.u32 %s294, 8
        %p296 = scmp.lt.s32.totalorder %s20, 1
        %s297 = scalar_select %p296, %s20, 1
        %p298 = scmp.lt.s32.totalorder %s295, 17
        %s299 = scalar_select %p298, %s295, 17
        %s300 = smul.addr %s299, 3
        %s301 = smul.addr %s297, 54
        %s302 = sadd.s32 %s300, %s301
        %s303 = smul.addr %s302, 8
        %s304 = scalar_lea.vmem %s1, %s303
        %p305 = pneg %p83
        %p306 = pneg %p80
        %s307 = sadd.s32 %s21, 1
        %s308 = smul.u32 %s307, 8
        %s309 = sadd.s32 %s308, 1
        %p310 = scmp.lt.s32.totalorder %s20, 1
        %s311 = scalar_select %p310, %s20, 1
        %p312 = scmp.lt.s32.totalorder %s309, 17
        %s313 = scalar_select %p312, %s309, 17
        %s314 = smul.addr %s313, 3
        %s315 = smul.addr %s311, 54
        %s316 = sadd.s32 %s314, %s315
        %s317 = smul.addr %s316, 8
        %s318 = scalar_lea.vmem %s2, %s317
        %p319 = pneg %p117
        %p320 = pneg %p114
        %p321 = pneg %p138
        %p322 = pneg %p135
        %p323 = pneg %p159
        %p324 = pneg %p156
        %p325 = pneg %p187
        %p326 = pneg %p184
        %s327 = sand.u32 %s174, 1
        %s328 = sand.u32 %s174, 1
        %s329 = smul.addr %s328, 512
        %s330 = scalar_lea.vmem [#allocation2], %s329
        %s331 = smul.u32 8, %s21
        %s332 = ssub.s32 18, %s331
        %p333 = scmp.lt.s32.totalorder %s332, 8
        %s334 = scalar_select %p333, %s332, 8
        %s335 = smul.u32 8, %s334
        %s336 = smul.u32 %s335, 3
        %p337 = scmp.lt.s32.totalorder %s20, 1
        %s338 = scalar_select %p337, %s20, 1
        %p339 = scmp.lt.s32.totalorder %s331, 17
        %s340 = scalar_select %p339, %s331, 17
        %s341 = smul.addr %s340, 3
        %s342 = smul.addr %s338, 54
        %s343 = sadd.s32 %s341, %s342
        %s344 = smul.addr %s343, 8
        %s345 = scalar_lea.vmem %s0, %s344
        %s346 = smul.u32 8, %s21
        %s347 = ssub.s32 18, %s346
        %p348 = scmp.lt.s32.totalorder %s347, 8
        %s349 = scalar_select %p348, %s347, 8
        %s350 = smul.u32 8, %s349
        %s351 = smul.u32 %s350, 3
        %s352 = sadd.s32 %s21, 1
        %s353 = smul.u32 %s352, 8
        %p354 = scmp.lt.s32.totalorder %s20, 1
        %s355 = scalar_select %p354, %s20, 1
        %p356 = scmp.lt.s32.totalorder %s353, 17
        %s357 = scalar_select %p356, %s353, 17
        %s358 = smul.addr %s357, 3
        %s359 = smul.addr %s355, 54
        %s360 = sadd.s32 %s358, %s359
        %s361 = smul.addr %s360, 8
        %s362 = scalar_lea.vmem %s1, %s361
        %s363 = sadd.s32 %s21, 1
        %s364 = smul.u32 %s363, 8
        %s365 = sadd.s32 %s21, 1
        %s366 = smul.u32 %s365, 8
        %s367 = sadd.s32 %s366, 1
        %p368 = scmp.lt.s32.totalorder %s20, 1
        %s369 = scalar_select %p368, %s20, 1
        %p370 = scmp.lt.s32.totalorder %s367, 17
        %s371 = scalar_select %p370, %s367, 17
        %s372 = smul.addr %s371, 3
        %s373 = smul.addr %s369, 54
        %s374 = sadd.s32 %s372, %s373
        %s375 = smul.addr %s374, 8
        %s376 = scalar_lea.vmem %s2, %s375
        %s377 = sadd.s32 %s21, 1
        %s378 = smul.u32 %s377, 8
        %s379 = sadd.s32 %s378, 1
        %s380 = smul.u32 8, %s21
        %v381 = vld [vmem:[%s345] sm:$0xff]
        %v382 = vld [vmem:[%s345 + $0x8] sm:$0xff]
        %v383 = vld [vmem:[%s345 + $0x10] sm:$0x3]
        %v384 = vld [vmem:[%s345 + $0x18] sm:$0xff]
        %v385 = vld [vmem:[%s345 + $0x20] sm:$0xff]
        %v386 = vld [vmem:[%s345 + $0x28] sm:$0x3]
        %v387 = vld [vmem:[%s345 + $0x30] sm:$0xff]
        %v388 = vld [vmem:[%s345 + $0x38] sm:$0xff]
        %v389 = vld [vmem:[%s345 + $0x40] sm:$0x3]
        %v390 = vld [vmem:[%s345 + $0x48] sm:$0xff]
        %v391 = vld [vmem:[%s345 + $0x50] sm:$0xff]
        %v392 = vld [vmem:[%s345 + $0x58] sm:$0x3]
        %v393 = vld [vmem:[%s345 + $0x60] sm:$0xff]
        %v394 = vld [vmem:[%s345 + $0x68] sm:$0xff]
        %v395 = vld [vmem:[%s345 + $0x70] sm:$0x3]
        %v396 = vld [vmem:[%s345 + $0x78] sm:$0xff]
        %v397 = vld [vmem:[%s345 + $0x80] sm:$0xff]
        %v398 = vld [vmem:[%s345 + $0x88] sm:$0x3]
        %v399 = vld [vmem:[%s345 + $0x90] sm:$0xff]
        %v400 = vld [vmem:[%s345 + $0x98] sm:$0xff]
        %v401 = vld [vmem:[%s345 + $0xa0] sm:$0x3]
        %v402 = vld [vmem:[%s345 + $0xa8] sm:$0xff]
        %v403 = vld [vmem:[%s345 + $0xb0] sm:$0xff]
        %v404 = vld [vmem:[%s345 + $0xb8] sm:$0x3]
        %v405 = vld [vmem:[%s362] sm:$0xff]
        %v406 = vld [vmem:[%s362 + $0x8] sm:$0xff]
        %v407 = vld [vmem:[%s362 + $0x10] sm:$0x3]
        %v408 = vld [vmem:[%s376] sm:$0xff]
        %v409 = vld [vmem:[%s376 + $0x8] sm:$0xff]
        %v410 = vld [vmem:[%s376 + $0x10] sm:$0x3]
        %v411 = vld [vmem:[%s4] sm:$0x1]
        %vm436 = vcmask 1046528
        %v437 = vrot.slane %v381, 1
        %v438 = vrot.slane %v382, 1
        %v439 = vsel %vm436, %v437, %v438
        %v440 = vrot.slane %v383, 1
        %v441 = vsel %vm436, %v438, %v440
        %v442 = vrot.slane %v384, 1
        %v443 = vrot.slane %v385, 1
        %v444 = vsel %vm436, %v442, %v443
        %v445 = vrot.slane %v386, 1
        %v446 = vsel %vm436, %v443, %v445
        %v447 = vrot.slane %v387, 1
        %v448 = vrot.slane %v388, 1
        %v449 = vsel %vm436, %v447, %v448
        %v450 = vrot.slane %v389, 1
        %v451 = vsel %vm436, %v448, %v450
        %v452 = vrot.slane %v390, 1
        %v453 = vrot.slane %v391, 1
        %v454 = vsel %vm436, %v452, %v453
        %v455 = vrot.slane %v392, 1
        %v456 = vsel %vm436, %v453, %v455
        %v457 = vrot.slane %v393, 1
        %v458 = vrot.slane %v394, 1
        %v459 = vsel %vm436, %v457, %v458
        %v460 = vrot.slane %v395, 1
        %v461 = vsel %vm436, %v458, %v460
        %v462 = vrot.slane %v396, 1
        %v463 = vrot.slane %v397, 1
        %v464 = vsel %vm436, %v462, %v463
        %v465 = vrot.slane %v398, 1
        %v466 = vsel %vm436, %v463, %v465
        %v467 = vrot.slane %v399, 1
        %v468 = vrot.slane %v400, 1
        %v469 = vsel %vm436, %v467, %v468
        %v470 = vrot.slane %v401, 1
        %v471 = vsel %vm436, %v468, %v470
        %v472 = vrot.slane %v402, 1
        %v473 = vrot.slane %v403, 1
        %v474 = vsel %vm436, %v472, %v473
        %v475 = vrot.slane %v404, 1
        %v476 = vsel %vm436, %v473, %v475
        %v496 = vrot.slane %v405, 1
        %v497 = vrot.slane %v406, 1
        %v498 = vsel %vm436, %v496, %v497
        %v499 = vrot.slane %v407, 1
        %v500 = vsel %vm436, %v497, %v499
        %503 = vrot.lane.b32.xlu0 %v439, 4
        %v504 = vpop.permute.xlu0 %503
        %505 = vrot.lane.b32.xlu0 %v441, 4
        %v506 = vpop.permute.xlu0 %505
        %507 = vrot.lane.b32.xlu0 %v444, 4
        %v508 = vpop.permute.xlu0 %507
        %509 = vrot.lane.b32.xlu0 %v446, 4
        %v510 = vpop.permute.xlu0 %509
        %511 = vrot.lane.b32.xlu0 %v449, 4
        %v512 = vpop.permute.xlu0 %511
        %513 = vrot.lane.b32.xlu0 %v451, 4
        %v514 = vpop.permute.xlu0 %513
        %515 = vrot.lane.b32.xlu0 %v454, 4
        %v516 = vpop.permute.xlu0 %515
        %517 = vrot.lane.b32.xlu0 %v456, 4
        %v518 = vpop.permute.xlu0 %517
        %519 = vrot.lane.b32.xlu0 %v459, 4
        %v520 = vpop.permute.xlu0 %519
        %521 = vrot.lane.b32.xlu0 %v461, 4
        %v522 = vpop.permute.xlu0 %521
        %523 = vrot.lane.b32.xlu0 %v464, 4
        %v524 = vpop.permute.xlu0 %523
        %525 = vrot.lane.b32.xlu0 %v466, 4
        %v526 = vpop.permute.xlu0 %525
        %527 = vrot.lane.b32.xlu0 %v469, 4
        %v528 = vpop.permute.xlu0 %527
        %529 = vrot.lane.b32.xlu0 %v471, 4
        %v530 = vpop.permute.xlu0 %529
        %531 = vrot.lane.b32.xlu0 %v474, 4
        %v532 = vpop.permute.xlu0 %531
        %533 = vrot.lane.b32.xlu0 %v476, 4
        %v534 = vpop.permute.xlu0 %533
        %551 = vrot.lane.b32.xlu0 %v384, 8
        %v552 = vpop.permute.xlu0 %551
        %553 = vrot.lane.b32.xlu0 %v385, 8
        %v554 = vpop.permute.xlu0 %553
        %555 = vrot.lane.b32.xlu0 %v387, 8
        %v556 = vpop.permute.xlu0 %555
        %557 = vrot.lane.b32.xlu0 %v388, 8
        %v558 = vpop.permute.xlu0 %557
        %559 = vrot.lane.b32.xlu0 %v390, 8
        %v560 = vpop.permute.xlu0 %559
        %561 = vrot.lane.b32.xlu0 %v391, 8
        %v562 = vpop.permute.xlu0 %561
        %563 = vrot.lane.b32.xlu0 %v393, 8
        %v564 = vpop.permute.xlu0 %563
        %565 = vrot.lane.b32.xlu0 %v394, 8
        %v566 = vpop.permute.xlu0 %565
        %567 = vrot.lane.b32.xlu0 %v396, 8
        %v568 = vpop.permute.xlu0 %567
        %569 = vrot.lane.b32.xlu0 %v397, 8
        %v570 = vpop.permute.xlu0 %569
        %571 = vrot.lane.b32.xlu0 %v399, 8
        %v572 = vpop.permute.xlu0 %571
        %573 = vrot.lane.b32.xlu0 %v400, 8
        %v574 = vpop.permute.xlu0 %573
        %575 = vrot.lane.b32.xlu0 %v402, 8
        %v576 = vpop.permute.xlu0 %575
        %577 = vrot.lane.b32.xlu0 %v403, 8
        %v578 = vpop.permute.xlu0 %577
        %579 = vrot.lane.b32.xlu0 %v405, 8
        %v580 = vpop.permute.xlu0 %579
        %581 = vrot.lane.b32.xlu0 %v406, 8
        %v582 = vpop.permute.xlu0 %581
        %599 = vrot.lane.b32.xlu0 %v444, 12
        %v600 = vpop.permute.xlu0 %599
        %601 = vrot.lane.b32.xlu0 %v446, 12
        %v602 = vpop.permute.xlu0 %601
        %603 = vrot.lane.b32.xlu0 %v449, 12
        %v604 = vpop.permute.xlu0 %603
        %605 = vrot.lane.b32.xlu0 %v451, 12
        %v606 = vpop.permute.xlu0 %605
        %607 = vrot.lane.b32.xlu0 %v454, 12
        %v608 = vpop.permute.xlu0 %607
        %609 = vrot.lane.b32.xlu0 %v456, 12
        %v610 = vpop.permute.xlu0 %609
        %611 = vrot.lane.b32.xlu0 %v459, 12
        %v612 = vpop.permute.xlu0 %611
        %613 = vrot.lane.b32.xlu0 %v461, 12
        %v614 = vpop.permute.xlu0 %613
        %615 = vrot.lane.b32.xlu0 %v464, 12
        %v616 = vpop.permute.xlu0 %615
        %617 = vrot.lane.b32.xlu0 %v466, 12
        %v618 = vpop.permute.xlu0 %617
        %619 = vrot.lane.b32.xlu0 %v469, 12
        %v620 = vpop.permute.xlu0 %619
        %621 = vrot.lane.b32.xlu0 %v471, 12
        %v622 = vpop.permute.xlu0 %621
        %623 = vrot.lane.b32.xlu0 %v474, 12
        %v624 = vpop.permute.xlu0 %623
        %625 = vrot.lane.b32.xlu0 %v476, 12
        %v626 = vpop.permute.xlu0 %625
        %627 = vrot.lane.b32.xlu0 %v498, 12
        %v628 = vpop.permute.xlu0 %627
        %629 = vrot.lane.b32.xlu0 %v500, 12
        %v630 = vpop.permute.xlu0 %629
        %vm647 = vcmask 31744
        %v648 = vsel %vm647, %v381, %v504
        %v649 = vsel %vm647, %v382, %v506
        %v650 = vsel %vm647, %v384, %v508
        %v651 = vsel %vm647, %v385, %v510
        %v652 = vsel %vm647, %v387, %v512
        %v653 = vsel %vm647, %v388, %v514
        %v654 = vsel %vm647, %v390, %v516
        %v655 = vsel %vm647, %v391, %v518
        %v656 = vsel %vm647, %v393, %v520
        %v657 = vsel %vm647, %v394, %v522
        %v658 = vsel %vm647, %v396, %v524
        %v659 = vsel %vm647, %v397, %v526
        %v660 = vsel %vm647, %v399, %v528
        %v661 = vsel %vm647, %v400, %v530
        %v662 = vsel %vm647, %v402, %v532
        %v663 = vsel %vm647, %v403, %v534
        %vm664 = vcmask 64512
        %v665 = vsel %vm664, %v648, %v552
        %v666 = vsel %vm664, %v649, %v554
        %v667 = vsel %vm664, %v650, %v556
        %v668 = vsel %vm664, %v651, %v558
        %v669 = vsel %vm664, %v652, %v560
        %v670 = vsel %vm664, %v653, %v562
        %v671 = vsel %vm664, %v654, %v564
        %v672 = vsel %vm664, %v655, %v566
        %v673 = vsel %vm664, %v656, %v568
        %v674 = vsel %vm664, %v657, %v570
        %v675 = vsel %vm664, %v658, %v572
        %v676 = vsel %vm664, %v659, %v574
        %v677 = vsel %vm664, %v660, %v576
        %v678 = vsel %vm664, %v661, %v578
        %v679 = vsel %vm664, %v662, %v580
        %v680 = vsel %vm664, %v663, %v582
        %vm681 = vcmask 97280
        %v682 = vsel %vm681, %v665, %v600
        %v683 = vsel %vm681, %v666, %v602
        %v684 = vsel %vm681, %v667, %v604
        %v685 = vsel %vm681, %v668, %v606
        %v686 = vsel %vm681, %v669, %v608
        %v687 = vsel %vm681, %v670, %v610
        %v688 = vsel %vm681, %v671, %v612
        %v689 = vsel %vm681, %v672, %v614
        %v690 = vsel %vm681, %v673, %v616
        %v691 = vsel %vm681, %v674, %v618
        %v692 = vsel %vm681, %v675, %v620
        %v693 = vsel %vm681, %v676, %v622
        %v694 = vsel %vm681, %v677, %v624
        %v695 = vsel %vm681, %v678, %v626
        %v696 = vsel %vm681, %v679, %v628
        %v697 = vsel %vm681, %v680, %v630
        %v698 = vld [vmem:[%s3] sm:$0xff]
        %v699 = vld [vmem:[%s3 + $0x8] sm:$0xff]
        %v701 = vperm.slane %v411, 0
        %vm703 = vcmask 130048
        %v705 = vsel %vm703, %v682, 0
        %v708 = vsel %vm703, %v683, 0
        %v711 = vsel %vm703, %v684, 0
        %v714 = vsel %vm703, %v685, 0
        %v717 = vsel %vm703, %v686, 0
        %v720 = vsel %vm703, %v687, 0
        %v723 = vsel %vm703, %v688, 0
        %v726 = vsel %vm703, %v689, 0
        %v729 = vsel %vm703, %v690, 0
        %v732 = vsel %vm703, %v691, 0
        %v735 = vsel %vm703, %v692, 0
        %v738 = vsel %vm703, %v693, 0
        %v741 = vsel %vm703, %v694, 0
        %v744 = vsel %vm703, %v695, 0
        %v747 = vsel %vm703, %v696, 0
        %v750 = vsel %vm703, %v697, 0
        %752 = vmatpush.msra.mxu0 0.0
        %753 = vmatpush.msra.mxu0 0.0
        %754 = vmatpush.msra.mxu0 0.0
        %755 = vmatpush.msra.mxu0 0.0
        %756 = vmatpush.msra.mxu0 0.0
        %757 = vmatpush.msra.mxu0 0.0
        %758 = vmatpush.msra.mxu0 0.0
        %759 = vmatpush.msra.mxu0 0.0
        %760 = vmatpush.msra.mxu0 0.0
        %761 = vmatpush.msra.mxu0 0.0
        %762 = vmatpush.msra.mxu0 0.0
        %763 = vmatpush.msra.mxu0 0.0
        %764 = vmatpush.msra.mxu0 0.0
        %765 = vmatpush.msra.mxu0 0.0
        %766 = vmatpush.msra.mxu0 %v699
        %767 = vmatpush.msra.mxu0 %v698
        %768 = vmatmul.f32.gmra.mxu0 %v705
        %v769 = vpop.f32.mrf.mxu0
        %v770 = vadd.f32 %v701, %v769
        %771 = vmatmul.f32.gmra.mxu0 %v708
        %v772 = vpop.f32.mrf.mxu0
        %v773 = vadd.f32 %v701, %v772
        %774 = vmatmul.f32.gmra.mxu0 %v711
        %v775 = vpop.f32.mrf.mxu0
        %v776 = vadd.f32 %v701, %v775
        %777 = vmatmul.f32.gmra.mxu0 %v714
        %v778 = vpop.f32.mrf.mxu0
        %v779 = vadd.f32 %v701, %v778
        %780 = vmatmul.f32.gmra.mxu0 %v717
        %v781 = vpop.f32.mrf.mxu0
        %v782 = vadd.f32 %v701, %v781
        %783 = vmatmul.f32.gmra.mxu0 %v720
        %v784 = vpop.f32.mrf.mxu0
        %v785 = vadd.f32 %v701, %v784
        %786 = vmatmul.f32.gmra.mxu0 %v723
        %v787 = vpop.f32.mrf.mxu0
        %v788 = vadd.f32 %v701, %v787
        %789 = vmatmul.f32.gmra.mxu0 %v726
        %v790 = vpop.f32.mrf.mxu0
        %v791 = vadd.f32 %v701, %v790
        %792 = vmatmul.f32.gmra.mxu0 %v729
        %v793 = vpop.f32.mrf.mxu0
        %v794 = vadd.f32 %v701, %v793
        %795 = vmatmul.f32.gmra.mxu0 %v732
        %v796 = vpop.f32.mrf.mxu0
        %v797 = vadd.f32 %v701, %v796
        %798 = vmatmul.f32.gmra.mxu0 %v735
        %v799 = vpop.f32.mrf.mxu0
        %v800 = vadd.f32 %v701, %v799
        %801 = vmatmul.f32.gmra.mxu0 %v738
        %v802 = vpop.f32.mrf.mxu0
        %v803 = vadd.f32 %v701, %v802
        %804 = vmatmul.f32.gmra.mxu0 %v741
        %v805 = vpop.f32.mrf.mxu0
        %v806 = vadd.f32 %v701, %v805
        %807 = vmatmul.f32.gmra.mxu0 %v744
        %v808 = vpop.f32.mrf.mxu0
        %v809 = vadd.f32 %v701, %v808
        %810 = vmatmul.f32.gmra.mxu0 %v747
        %v811 = vpop.f32.mrf.mxu0
        %v812 = vadd.f32 %v701, %v811
        %813 = vmatmul.f32.gmra.mxu0 %v750
        %v814 = vpop.f32.mrf.mxu0
        %v815 = vadd.f32 %v701, %v814
        %816 = vdwg.mxu0
        %817 = vst.msk [vmem:[%s330] sm:$0xff] %vm647, %v770
        %818 = vst.msk [vmem:[%s330 + $0x8] sm:$0xff] %vm647, %v773
        %819 = vst.msk [vmem:[%s330 + $0x10] sm:$0xff] %vm647, %v776
        %820 = vst.msk [vmem:[%s330 + $0x18] sm:$0xff] %vm647, %v779
        %821 = vst.msk [vmem:[%s330 + $0x20] sm:$0xff] %vm647, %v782
        %822 = vst.msk [vmem:[%s330 + $0x28] sm:$0xff] %vm647, %v785
        %823 = vst.msk [vmem:[%s330 + $0x30] sm:$0xff] %vm647, %v788
        %824 = vst.msk [vmem:[%s330 + $0x38] sm:$0xff] %vm647, %v791
        %825 = vst.msk [vmem:[%s330 + $0x40] sm:$0xff] %vm647, %v794
        %826 = vst.msk [vmem:[%s330 + $0x48] sm:$0xff] %vm647, %v797
        %827 = vst.msk [vmem:[%s330 + $0x50] sm:$0xff] %vm647, %v800
        %828 = vst.msk [vmem:[%s330 + $0x58] sm:$0xff] %vm647, %v803
        %829 = vst.msk [vmem:[%s330 + $0x60] sm:$0xff] %vm647, %v806
        %830 = vst.msk [vmem:[%s330 + $0x68] sm:$0xff] %vm647, %v809
        %831 = vst.msk [vmem:[%s330 + $0x70] sm:$0xff] %vm647, %v812
        %832 = vst.msk [vmem:[%s330 + $0x78] sm:$0xff] %vm647, %v815
        %vm833 = vcmask 1045504
        %v834 = vrot.slane %v381, 2
        %v835 = vrot.slane %v382, 2
        %v836 = vsel %vm833, %v834, %v835
        %v837 = vrot.slane %v383, 2
        %v838 = vsel %vm833, %v835, %v837
        %v839 = vrot.slane %v384, 2
        %v840 = vrot.slane %v385, 2
        %v841 = vsel %vm833, %v839, %v840
        %v842 = vrot.slane %v386, 2
        %v843 = vsel %vm833, %v840, %v842
        %v844 = vrot.slane %v387, 2
        %v845 = vrot.slane %v388, 2
        %v846 = vsel %vm833, %v844, %v845
        %v847 = vrot.slane %v389, 2
        %v848 = vsel %vm833, %v845, %v847
        %v849 = vrot.slane %v390, 2
        %v850 = vrot.slane %v391, 2
        %v851 = vsel %vm833, %v849, %v850
        %v852 = vrot.slane %v392, 2
        %v853 = vsel %vm833, %v850, %v852
        %v854 = vrot.slane %v393, 2
        %v855 = vrot.slane %v394, 2
        %v856 = vsel %vm833, %v854, %v855
        %v857 = vrot.slane %v395, 2
        %v858 = vsel %vm833, %v855, %v857
        %v859 = vrot.slane %v396, 2
        %v860 = vrot.slane %v397, 2
        %v861 = vsel %vm833, %v859, %v860
        %v862 = vrot.slane %v398, 2
        %v863 = vsel %vm833, %v860, %v862
        %v864 = vrot.slane %v399, 2
        %v865 = vrot.slane %v400, 2
        %v866 = vsel %vm833, %v864, %v865
        %v867 = vrot.slane %v401, 2
        %v868 = vsel %vm833, %v865, %v867
        %v869 = vrot.slane %v402, 2
        %v870 = vrot.slane %v403, 2
        %v871 = vsel %vm833, %v869, %v870
        %v872 = vrot.slane %v404, 2
        %v873 = vsel %vm833, %v870, %v872
        %v874 = vrot.slane %v405, 2
        %v875 = vrot.slane %v406, 2
        %v876 = vsel %vm833, %v874, %v875
        %v877 = vrot.slane %v407, 2
        %v878 = vsel %vm833, %v875, %v877
        %879 = vrot.lane.b32.xlu0 %v836, 4
        %v880 = vpop.permute.xlu0 %879
        %881 = vrot.lane.b32.xlu0 %v838, 4
        %v882 = vpop.permute.xlu0 %881
        %883 = vrot.lane.b32.xlu0 %v841, 4
        %v884 = vpop.permute.xlu0 %883
        %885 = vrot.lane.b32.xlu0 %v843, 4
        %v886 = vpop.permute.xlu0 %885
        %887 = vrot.lane.b32.xlu0 %v846, 4
        %v888 = vpop.permute.xlu0 %887
        %889 = vrot.lane.b32.xlu0 %v848, 4
        %v890 = vpop.permute.xlu0 %889
        %891 = vrot.lane.b32.xlu0 %v851, 4
        %v892 = vpop.permute.xlu0 %891
        %893 = vrot.lane.b32.xlu0 %v853, 4
        %v894 = vpop.permute.xlu0 %893
        %895 = vrot.lane.b32.xlu0 %v856, 4
        %v896 = vpop.permute.xlu0 %895
        %897 = vrot.lane.b32.xlu0 %v858, 4
        %v898 = vpop.permute.xlu0 %897
        %899 = vrot.lane.b32.xlu0 %v861, 4
        %v900 = vpop.permute.xlu0 %899
        %901 = vrot.lane.b32.xlu0 %v863, 4
        %v902 = vpop.permute.xlu0 %901
        %903 = vrot.lane.b32.xlu0 %v866, 4
        %v904 = vpop.permute.xlu0 %903
        %905 = vrot.lane.b32.xlu0 %v868, 4
        %v906 = vpop.permute.xlu0 %905
        %907 = vrot.lane.b32.xlu0 %v871, 4
        %v908 = vpop.permute.xlu0 %907
        %909 = vrot.lane.b32.xlu0 %v873, 4
        %v910 = vpop.permute.xlu0 %909
        %927 = vrot.lane.b32.xlu0 %v444, 8
        %v928 = vpop.permute.xlu0 %927
        %929 = vrot.lane.b32.xlu0 %v446, 8
        %v930 = vpop.permute.xlu0 %929
        %931 = vrot.lane.b32.xlu0 %v449, 8
        %v932 = vpop.permute.xlu0 %931
        %933 = vrot.lane.b32.xlu0 %v451, 8
        %v934 = vpop.permute.xlu0 %933
        %935 = vrot.lane.b32.xlu0 %v454, 8
        %v936 = vpop.permute.xlu0 %935
        %937 = vrot.lane.b32.xlu0 %v456, 8
        %v938 = vpop.permute.xlu0 %937
        %939 = vrot.lane.b32.xlu0 %v459, 8
        %v940 = vpop.permute.xlu0 %939
        %941 = vrot.lane.b32.xlu0 %v461, 8
        %v942 = vpop.permute.xlu0 %941
        %943 = vrot.lane.b32.xlu0 %v464, 8
        %v944 = vpop.permute.xlu0 %943
        %945 = vrot.lane.b32.xlu0 %v466, 8
        %v946 = vpop.permute.xlu0 %945
        %947 = vrot.lane.b32.xlu0 %v469, 8
        %v948 = vpop.permute.xlu0 %947
        %949 = vrot.lane.b32.xlu0 %v471, 8
        %v950 = vpop.permute.xlu0 %949
        %951 = vrot.lane.b32.xlu0 %v474, 8
        %v952 = vpop.permute.xlu0 %951
        %953 = vrot.lane.b32.xlu0 %v476, 8
        %v954 = vpop.permute.xlu0 %953
        %955 = vrot.lane.b32.xlu0 %v498, 8
        %v956 = vpop.permute.xlu0 %955
        %957 = vrot.lane.b32.xlu0 %v500, 8
        %v958 = vpop.permute.xlu0 %957
        %975 = vrot.lane.b32.xlu0 %v841, 12
        %v976 = vpop.permute.xlu0 %975
        %977 = vrot.lane.b32.xlu0 %v843, 12
        %v978 = vpop.permute.xlu0 %977
        %979 = vrot.lane.b32.xlu0 %v846, 12
        %v980 = vpop.permute.xlu0 %979
        %981 = vrot.lane.b32.xlu0 %v848, 12
        %v982 = vpop.permute.xlu0 %981
        %983 = vrot.lane.b32.xlu0 %v851, 12
        %v984 = vpop.permute.xlu0 %983
        %985 = vrot.lane.b32.xlu0 %v853, 12
        %v986 = vpop.permute.xlu0 %985
        %987 = vrot.lane.b32.xlu0 %v856, 12
        %v988 = vpop.permute.xlu0 %987
        %989 = vrot.lane.b32.xlu0 %v858, 12
        %v990 = vpop.permute.xlu0 %989
        %991 = vrot.lane.b32.xlu0 %v861, 12
        %v992 = vpop.permute.xlu0 %991
        %993 = vrot.lane.b32.xlu0 %v863, 12
        %v994 = vpop.permute.xlu0 %993
        %995 = vrot.lane.b32.xlu0 %v866, 12
        %v996 = vpop.permute.xlu0 %995
        %997 = vrot.lane.b32.xlu0 %v868, 12
        %v998 = vpop.permute.xlu0 %997
        %999 = vrot.lane.b32.xlu0 %v871, 12
        %v1000 = vpop.permute.xlu0 %999
        %1001 = vrot.lane.b32.xlu0 %v873, 12
        %v1002 = vpop.permute.xlu0 %1001
        %1003 = vrot.lane.b32.xlu0 %v876, 12
        %v1004 = vpop.permute.xlu0 %1003
        %1005 = vrot.lane.b32.xlu0 %v878, 12
        %v1006 = vpop.permute.xlu0 %1005
        %v1023 = vsel %vm647, %v439, %v880
        %v1024 = vsel %vm647, %v441, %v882
        %v1025 = vsel %vm647, %v444, %v884
        %v1026 = vsel %vm647, %v446, %v886
        %v1027 = vsel %vm647, %v449, %v888
        %v1028 = vsel %vm647, %v451, %v890
        %v1029 = vsel %vm647, %v454, %v892
        %v1030 = vsel %vm647, %v456, %v894
        %v1031 = vsel %vm647, %v459, %v896
        %v1032 = vsel %vm647, %v461, %v898
        %v1033 = vsel %vm647, %v464, %v900
        %v1034 = vsel %vm647, %v466, %v902
        %v1035 = vsel %vm647, %v469, %v904
        %v1036 = vsel %vm647, %v471, %v906
        %v1037 = vsel %vm647, %v474, %v908
        %v1038 = vsel %vm647, %v476, %v910
        %v1039 = vsel %vm664, %v1023, %v928
        %v1040 = vsel %vm664, %v1024, %v930
        %v1041 = vsel %vm664, %v1025, %v932
        %v1042 = vsel %vm664, %v1026, %v934
        %v1043 = vsel %vm664, %v1027, %v936
        %v1044 = vsel %vm664, %v1028, %v938
        %v1045 = vsel %vm664, %v1029, %v940
        %v1046 = vsel %vm664, %v1030, %v942
        %v1047 = vsel %vm664, %v1031, %v944
        %v1048 = vsel %vm664, %v1032, %v946
        %v1049 = vsel %vm664, %v1033, %v948
        %v1050 = vsel %vm664, %v1034, %v950
        %v1051 = vsel %vm664, %v1035, %v952
        %v1052 = vsel %vm664, %v1036, %v954
        %v1053 = vsel %vm664, %v1037, %v956
        %v1054 = vsel %vm664, %v1038, %v958
        %v1055 = vsel %vm681, %v1039, %v976
        %v1056 = vsel %vm681, %v1040, %v978
        %v1057 = vsel %vm681, %v1041, %v980
        %v1058 = vsel %vm681, %v1042, %v982
        %v1059 = vsel %vm681, %v1043, %v984
        %v1060 = vsel %vm681, %v1044, %v986
        %v1061 = vsel %vm681, %v1045, %v988
        %v1062 = vsel %vm681, %v1046, %v990
        %v1063 = vsel %vm681, %v1047, %v992
        %v1064 = vsel %vm681, %v1048, %v994
        %v1065 = vsel %vm681, %v1049, %v996
        %v1066 = vsel %vm681, %v1050, %v998
        %v1067 = vsel %vm681, %v1051, %v1000
        %v1068 = vsel %vm681, %v1052, %v1002
        %v1069 = vsel %vm681, %v1053, %v1004
        %v1070 = vsel %vm681, %v1054, %v1006
        %s1071 = scalar_lea.vmem %s3, 16
        %v1072 = vld [vmem:[%s1071] sm:$0xff]
        %v1073 = vld [vmem:[%s1071 + $0x8] sm:$0xff]
        %v1075 = vsel %vm703, %v1055, 0
        %v1078 = vsel %vm703, %v1056, 0
        %v1081 = vsel %vm703, %v1057, 0
        %v1084 = vsel %vm703, %v1058, 0
        %v1087 = vsel %vm703, %v1059, 0
        %v1090 = vsel %vm703, %v1060, 0
        %v1093 = vsel %vm703, %v1061, 0
        %v1096 = vsel %vm703, %v1062, 0
        %v1099 = vsel %vm703, %v1063, 0
        %v1102 = vsel %vm703, %v1064, 0
        %v1105 = vsel %vm703, %v1065, 0
        %v1108 = vsel %vm703, %v1066, 0
        %v1111 = vsel %vm703, %v1067, 0
        %v1114 = vsel %vm703, %v1068, 0
        %v1117 = vsel %vm703, %v1069, 0
        %v1120 = vsel %vm703, %v1070, 0
        %1122 = vmatpush.msra.mxu0 0.0
        %1123 = vmatpush.msra.mxu0 0.0
        %1124 = vmatpush.msra.mxu0 0.0
        %1125 = vmatpush.msra.mxu0 0.0
        %1126 = vmatpush.msra.mxu0 0.0
        %1127 = vmatpush.msra.mxu0 0.0
        %1128 = vmatpush.msra.mxu0 0.0
        %1129 = vmatpush.msra.mxu0 0.0
        %1130 = vmatpush.msra.mxu0 0.0
        %1131 = vmatpush.msra.mxu0 0.0
        %1132 = vmatpush.msra.mxu0 0.0
        %1133 = vmatpush.msra.mxu0 0.0
        %1134 = vmatpush.msra.mxu0 0.0
        %1135 = vmatpush.msra.mxu0 0.0
        %1136 = vmatpush.msra.mxu0 %v1073
        %1137 = vmatpush.msra.mxu0 %v1072
        %1138 = vmatmul.f32.gmra.mxu0 %v1075
        %v1139 = vpop.f32.mrf.mxu0
        %v1140 = vadd.f32 %v701, %v1139
        %1141 = vmatmul.f32.gmra.mxu0 %v1078
        %v1142 = vpop.f32.mrf.mxu0
        %v1143 = vadd.f32 %v701, %v1142
        %1144 = vmatmul.f32.gmra.mxu0 %v1081
        %v1145 = vpop.f32.mrf.mxu0
        %v1146 = vadd.f32 %v701, %v1145
        %1147 = vmatmul.f32.gmra.mxu0 %v1084
        %v1148 = vpop.f32.mrf.mxu0
        %v1149 = vadd.f32 %v701, %v1148
        %1150 = vmatmul.f32.gmra.mxu0 %v1087
        %v1151 = vpop.f32.mrf.mxu0
        %v1152 = vadd.f32 %v701, %v1151
        %1153 = vmatmul.f32.gmra.mxu0 %v1090
        %v1154 = vpop.f32.mrf.mxu0
        %v1155 = vadd.f32 %v701, %v1154
        %1156 = vmatmul.f32.gmra.mxu0 %v1093
        %v1157 = vpop.f32.mrf.mxu0
        %v1158 = vadd.f32 %v701, %v1157
        %1159 = vmatmul.f32.gmra.mxu0 %v1096
        %v1160 = vpop.f32.mrf.mxu0
        %v1161 = vadd.f32 %v701, %v1160
        %1162 = vmatmul.f32.gmra.mxu0 %v1099
        %v1163 = vpop.f32.mrf.mxu0
        %v1164 = vadd.f32 %v701, %v1163
        %1165 = vmatmul.f32.gmra.mxu0 %v1102
        %v1166 = vpop.f32.mrf.mxu0
        %v1167 = vadd.f32 %v701, %v1166
        %1168 = vmatmul.f32.gmra.mxu0 %v1105
        %v1169 = vpop.f32.mrf.mxu0
        %v1170 = vadd.f32 %v701, %v1169
        %1171 = vmatmul.f32.gmra.mxu0 %v1108
        %v1172 = vpop.f32.mrf.mxu0
        %v1173 = vadd.f32 %v701, %v1172
        %1174 = vmatmul.f32.gmra.mxu0 %v1111
        %v1175 = vpop.f32.mrf.mxu0
        %v1176 = vadd.f32 %v701, %v1175
        %1177 = vmatmul.f32.gmra.mxu0 %v1114
        %v1178 = vpop.f32.mrf.mxu0
        %v1179 = vadd.f32 %v701, %v1178
        %1180 = vmatmul.f32.gmra.mxu0 %v1117
        %v1181 = vpop.f32.mrf.mxu0
        %v1182 = vadd.f32 %v701, %v1181
        %1183 = vmatmul.f32.gmra.mxu0 %v1120
        %v1184 = vpop.f32.mrf.mxu0
        %v1185 = vadd.f32 %v701, %v1184
        %1186 = vdwg.mxu0
        %s1187 = scalar_lea.vmem %s330, 128 [#allocation2]
        %1188 = vst.msk [vmem:[%s1187] sm:$0xff] %vm647, %v1140
        %1189 = vst.msk [vmem:[%s1187 + $0x8] sm:$0xff] %vm647, %v1143
        %1190 = vst.msk [vmem:[%s1187 + $0x10] sm:$0xff] %vm647, %v1146
        %1191 = vst.msk [vmem:[%s1187 + $0x18] sm:$0xff] %vm647, %v1149
        %1192 = vst.msk [vmem:[%s1187 + $0x20] sm:$0xff] %vm647, %v1152
        %1193 = vst.msk [vmem:[%s1187 + $0x28] sm:$0xff] %vm647, %v1155
        %1194 = vst.msk [vmem:[%s1187 + $0x30] sm:$0xff] %vm647, %v1158
        %1195 = vst.msk [vmem:[%s1187 + $0x38] sm:$0xff] %vm647, %v1161
        %1196 = vst.msk [vmem:[%s1187 + $0x40] sm:$0xff] %vm647, %v1164
        %1197 = vst.msk [vmem:[%s1187 + $0x48] sm:$0xff] %vm647, %v1167
        %1198 = vst.msk [vmem:[%s1187 + $0x50] sm:$0xff] %vm647, %v1170
        %1199 = vst.msk [vmem:[%s1187 + $0x58] sm:$0xff] %vm647, %v1173
        %1200 = vst.msk [vmem:[%s1187 + $0x60] sm:$0xff] %vm647, %v1176
        %1201 = vst.msk [vmem:[%s1187 + $0x68] sm:$0xff] %vm647, %v1179
        %1202 = vst.msk [vmem:[%s1187 + $0x70] sm:$0xff] %vm647, %v1182
        %1203 = vst.msk [vmem:[%s1187 + $0x78] sm:$0xff] %vm647, %v1185
        %v1207 = vrot.slane %v408, 1
        %v1208 = vrot.slane %v409, 1
        %v1209 = vsel %vm436, %v1207, %v1208
        %v1210 = vrot.slane %v410, 1
        %v1211 = vsel %vm436, %v1208, %v1210
        %1212 = vrot.lane.b32.xlu0 %v498, 4
        %v1213 = vpop.permute.xlu0 %1212
        %1214 = vrot.lane.b32.xlu0 %v500, 4
        %v1215 = vpop.permute.xlu0 %1214
        %1218 = vrot.lane.b32.xlu0 %v408, 8
        %v1219 = vpop.permute.xlu0 %1218
        %1220 = vrot.lane.b32.xlu0 %v409, 8
        %v1221 = vpop.permute.xlu0 %1220
        %1224 = vrot.lane.b32.xlu0 %v1209, 12
        %v1225 = vpop.permute.xlu0 %1224
        %1226 = vrot.lane.b32.xlu0 %v1211, 12
        %v1227 = vpop.permute.xlu0 %1226
        %v1230 = vsel %vm647, %v405, %v1213
        %v1231 = vsel %vm647, %v406, %v1215
        %v1232 = vsel %vm664, %v1230, %v1219
        %v1233 = vsel %vm664, %v1231, %v1221
        %v1234 = vsel %vm681, %v1232, %v1225
        %v1235 = vsel %vm681, %v1233, %v1227
        %s1236 = scalar_lea.vmem %s3, 32
        %v1237 = vld [vmem:[%s1236] sm:$0xff]
        %v1238 = vld [vmem:[%s1236 + $0x8] sm:$0xff]
        %v1240 = vsel %vm703, %v1234, 0
        %v1243 = vsel %vm703, %v1235, 0
        %1245 = vmatpush.msra.mxu0 0.0
        %1246 = vmatpush.msra.mxu0 0.0
        %1247 = vmatpush.msra.mxu0 0.0
        %1248 = vmatpush.msra.mxu0 0.0
        %1249 = vmatpush.msra.mxu0 0.0
        %1250 = vmatpush.msra.mxu0 0.0
        %1251 = vmatpush.msra.mxu0 0.0
        %1252 = vmatpush.msra.mxu0 0.0
        %1253 = vmatpush.msra.mxu0 0.0
        %1254 = vmatpush.msra.mxu0 0.0
        %1255 = vmatpush.msra.mxu0 0.0
        %1256 = vmatpush.msra.mxu0 0.0
        %1257 = vmatpush.msra.mxu0 0.0
        %1258 = vmatpush.msra.mxu0 0.0
        %1259 = vmatpush.msra.mxu0 %v1238
        %1260 = vmatpush.msra.mxu0 %v1237
        %1261 = vmatmul.f32.gmra.mxu0 %v711
        %v1262 = vpop.f32.mrf.mxu0
        %v1263 = vadd.f32 %v701, %v1262
        %1264 = vmatmul.f32.gmra.mxu0 %v714
        %v1265 = vpop.f32.mrf.mxu0
        %v1266 = vadd.f32 %v701, %v1265
        %1267 = vmatmul.f32.gmra.mxu0 %v717
        %v1268 = vpop.f32.mrf.mxu0
        %v1269 = vadd.f32 %v701, %v1268
        %1270 = vmatmul.f32.gmra.mxu0 %v720
        %v1271 = vpop.f32.mrf.mxu0
        %v1272 = vadd.f32 %v701, %v1271
        %1273 = vmatmul.f32.gmra.mxu0 %v723
        %v1274 = vpop.f32.mrf.mxu0
        %v1275 = vadd.f32 %v701, %v1274
        %1276 = vmatmul.f32.gmra.mxu0 %v726
        %v1277 = vpop.f32.mrf.mxu0
        %v1278 = vadd.f32 %v701, %v1277
        %1279 = vmatmul.f32.gmra.mxu0 %v729
        %v1280 = vpop.f32.mrf.mxu0
        %v1281 = vadd.f32 %v701, %v1280
        %1282 = vmatmul.f32.gmra.mxu0 %v732
        %v1283 = vpop.f32.mrf.mxu0
        %v1284 = vadd.f32 %v701, %v1283
        %1285 = vmatmul.f32.gmra.mxu0 %v735
        %v1286 = vpop.f32.mrf.mxu0
        %v1287 = vadd.f32 %v701, %v1286
        %1288 = vmatmul.f32.gmra.mxu0 %v738
        %v1289 = vpop.f32.mrf.mxu0
        %v1290 = vadd.f32 %v701, %v1289
        %1291 = vmatmul.f32.gmra.mxu0 %v741
        %v1292 = vpop.f32.mrf.mxu0
        %v1293 = vadd.f32 %v701, %v1292
        %1294 = vmatmul.f32.gmra.mxu0 %v744
        %v1295 = vpop.f32.mrf.mxu0
        %v1296 = vadd.f32 %v701, %v1295
        %1297 = vmatmul.f32.gmra.mxu0 %v747
        %v1298 = vpop.f32.mrf.mxu0
        %v1299 = vadd.f32 %v701, %v1298
        %1300 = vmatmul.f32.gmra.mxu0 %v750
        %v1301 = vpop.f32.mrf.mxu0
        %v1302 = vadd.f32 %v701, %v1301
        %1303 = vmatmul.f32.gmra.mxu0 %v1240
        %v1304 = vpop.f32.mrf.mxu0
        %v1305 = vadd.f32 %v701, %v1304
        %1306 = vmatmul.f32.gmra.mxu0 %v1243
        %v1307 = vpop.f32.mrf.mxu0
        %v1308 = vadd.f32 %v701, %v1307
        %1309 = vdwg.mxu0
        %s1310 = scalar_lea.vmem %s330, 256 [#allocation2]
        %1311 = vst.msk [vmem:[%s1310] sm:$0xff] %vm647, %v1263
        %1312 = vst.msk [vmem:[%s1310 + $0x8] sm:$0xff] %vm647, %v1266
        %1313 = vst.msk [vmem:[%s1310 + $0x10] sm:$0xff] %vm647, %v1269
        %1314 = vst.msk [vmem:[%s1310 + $0x18] sm:$0xff] %vm647, %v1272
        %1315 = vst.msk [vmem:[%s1310 + $0x20] sm:$0xff] %vm647, %v1275
        %1316 = vst.msk [vmem:[%s1310 + $0x28] sm:$0xff] %vm647, %v1278
        %1317 = vst.msk [vmem:[%s1310 + $0x30] sm:$0xff] %vm647, %v1281
        %1318 = vst.msk [vmem:[%s1310 + $0x38] sm:$0xff] %vm647, %v1284
        %1319 = vst.msk [vmem:[%s1310 + $0x40] sm:$0xff] %vm647, %v1287
        %1320 = vst.msk [vmem:[%s1310 + $0x48] sm:$0xff] %vm647, %v1290
        %1321 = vst.msk [vmem:[%s1310 + $0x50] sm:$0xff] %vm647, %v1293
        %1322 = vst.msk [vmem:[%s1310 + $0x58] sm:$0xff] %vm647, %v1296
        %1323 = vst.msk [vmem:[%s1310 + $0x60] sm:$0xff] %vm647, %v1299
        %1324 = vst.msk [vmem:[%s1310 + $0x68] sm:$0xff] %vm647, %v1302
        %1325 = vst.msk [vmem:[%s1310 + $0x70] sm:$0xff] %vm647, %v1305
        %1326 = vst.msk [vmem:[%s1310 + $0x78] sm:$0xff] %vm647, %v1308
        %v1327 = vrot.slane %v408, 2
        %v1328 = vrot.slane %v409, 2
        %v1329 = vsel %vm833, %v1327, %v1328
        %v1330 = vrot.slane %v410, 2
        %v1331 = vsel %vm833, %v1328, %v1330
        %1332 = vrot.lane.b32.xlu0 %v876, 4
        %v1333 = vpop.permute.xlu0 %1332
        %1334 = vrot.lane.b32.xlu0 %v878, 4
        %v1335 = vpop.permute.xlu0 %1334
        %1338 = vrot.lane.b32.xlu0 %v1209, 8
        %v1339 = vpop.permute.xlu0 %1338
        %1340 = vrot.lane.b32.xlu0 %v1211, 8
        %v1341 = vpop.permute.xlu0 %1340
        %1344 = vrot.lane.b32.xlu0 %v1329, 12
        %v1345 = vpop.permute.xlu0 %1344
        %1346 = vrot.lane.b32.xlu0 %v1331, 12
        %v1347 = vpop.permute.xlu0 %1346
        %v1350 = vsel %vm647, %v498, %v1333
        %v1351 = vsel %vm647, %v500, %v1335
        %v1352 = vsel %vm664, %v1350, %v1339
        %v1353 = vsel %vm664, %v1351, %v1341
        %v1354 = vsel %vm681, %v1352, %v1345
        %v1355 = vsel %vm681, %v1353, %v1347
        %s1356 = scalar_lea.vmem %s3, 48
        %v1357 = vld [vmem:[%s1356] sm:$0xff]
        %v1358 = vld [vmem:[%s1356 + $0x8] sm:$0xff]
        %v1360 = vsel %vm703, %v1354, 0
        %v1363 = vsel %vm703, %v1355, 0
        %1365 = vmatpush.msra.mxu0 0.0
        %1366 = vmatpush.msra.mxu0 0.0
        %1367 = vmatpush.msra.mxu0 0.0
        %1368 = vmatpush.msra.mxu0 0.0
        %1369 = vmatpush.msra.mxu0 0.0
        %1370 = vmatpush.msra.mxu0 0.0
        %1371 = vmatpush.msra.mxu0 0.0
        %1372 = vmatpush.msra.mxu0 0.0
        %1373 = vmatpush.msra.mxu0 0.0
        %1374 = vmatpush.msra.mxu0 0.0
        %1375 = vmatpush.msra.mxu0 0.0
        %1376 = vmatpush.msra.mxu0 0.0
        %1377 = vmatpush.msra.mxu0 0.0
        %1378 = vmatpush.msra.mxu0 0.0
        %1379 = vmatpush.msra.mxu0 %v1358
        %1380 = vmatpush.msra.mxu0 %v1357
        %1381 = vmatmul.f32.gmra.mxu0 %v1081
        %v1382 = vpop.f32.mrf.mxu0
        %v1383 = vadd.f32 %v701, %v1382
        %1384 = vmatmul.f32.gmra.mxu0 %v1084
        %v1385 = vpop.f32.mrf.mxu0
        %v1386 = vadd.f32 %v701, %v1385
        %1387 = vmatmul.f32.gmra.mxu0 %v1087
        %v1388 = vpop.f32.mrf.mxu0
        %v1389 = vadd.f32 %v701, %v1388
        %1390 = vmatmul.f32.gmra.mxu0 %v1090
        %v1391 = vpop.f32.mrf.mxu0
        %v1392 = vadd.f32 %v701, %v1391
        %1393 = vmatmul.f32.gmra.mxu0 %v1093
        %v1394 = vpop.f32.mrf.mxu0
        %v1395 = vadd.f32 %v701, %v1394
        %1396 = vmatmul.f32.gmra.mxu0 %v1096
        %v1397 = vpop.f32.mrf.mxu0
        %v1398 = vadd.f32 %v701, %v1397
        %1399 = vmatmul.f32.gmra.mxu0 %v1099
        %v1400 = vpop.f32.mrf.mxu0
        %v1401 = vadd.f32 %v701, %v1400
        %1402 = vmatmul.f32.gmra.mxu0 %v1102
        %v1403 = vpop.f32.mrf.mxu0
        %v1404 = vadd.f32 %v701, %v1403
        %1405 = vmatmul.f32.gmra.mxu0 %v1105
        %v1406 = vpop.f32.mrf.mxu0
        %v1407 = vadd.f32 %v701, %v1406
        %1408 = vmatmul.f32.gmra.mxu0 %v1108
        %v1409 = vpop.f32.mrf.mxu0
        %v1410 = vadd.f32 %v701, %v1409
        %1411 = vmatmul.f32.gmra.mxu0 %v1111
        %v1412 = vpop.f32.mrf.mxu0
        %v1413 = vadd.f32 %v701, %v1412
        %1414 = vmatmul.f32.gmra.mxu0 %v1114
        %v1415 = vpop.f32.mrf.mxu0
        %v1416 = vadd.f32 %v701, %v1415
        %1417 = vmatmul.f32.gmra.mxu0 %v1117
        %v1418 = vpop.f32.mrf.mxu0
        %v1419 = vadd.f32 %v701, %v1418
        %1420 = vmatmul.f32.gmra.mxu0 %v1120
        %v1421 = vpop.f32.mrf.mxu0
        %v1422 = vadd.f32 %v701, %v1421
        %1423 = vmatmul.f32.gmra.mxu0 %v1360
        %v1424 = vpop.f32.mrf.mxu0
        %v1425 = vadd.f32 %v701, %v1424
        %1426 = vmatmul.f32.gmra.mxu0 %v1363
        %v1427 = vpop.f32.mrf.mxu0
        %v1428 = vadd.f32 %v701, %v1427
        %1429 = vdwg.mxu0
        %s1430 = scalar_lea.vmem %s330, 384 [#allocation2]
        %1431 = vst.msk [vmem:[%s1430] sm:$0xff] %vm647, %v1383
        %1432 = vst.msk [vmem:[%s1430 + $0x8] sm:$0xff] %vm647, %v1386
        %1433 = vst.msk [vmem:[%s1430 + $0x10] sm:$0xff] %vm647, %v1389
        %1434 = vst.msk [vmem:[%s1430 + $0x18] sm:$0xff] %vm647, %v1392
        %1435 = vst.msk [vmem:[%s1430 + $0x20] sm:$0xff] %vm647, %v1395
        %1436 = vst.msk [vmem:[%s1430 + $0x28] sm:$0xff] %vm647, %v1398
        %1437 = vst.msk [vmem:[%s1430 + $0x30] sm:$0xff] %vm647, %v1401
        %1438 = vst.msk [vmem:[%s1430 + $0x38] sm:$0xff] %vm647, %v1404
        %1439 = vst.msk [vmem:[%s1430 + $0x40] sm:$0xff] %vm647, %v1407
        %1440 = vst.msk [vmem:[%s1430 + $0x48] sm:$0xff] %vm647, %v1410
        %1441 = vst.msk [vmem:[%s1430 + $0x50] sm:$0xff] %vm647, %v1413
        %1442 = vst.msk [vmem:[%s1430 + $0x58] sm:$0xff] %vm647, %v1416
        %1443 = vst.msk [vmem:[%s1430 + $0x60] sm:$0xff] %vm647, %v1419
        %1444 = vst.msk [vmem:[%s1430 + $0x68] sm:$0xff] %vm647, %v1422
        %1445 = vst.msk [vmem:[%s1430 + $0x70] sm:$0xff] %vm647, %v1425
        %1446 = vst.msk [vmem:[%s1430 + $0x78] sm:$0xff] %vm647, %v1428
        %s1447 = sand.u32 %s174, 1
        %s1448 = sand.u32 %s174, 1
        %s1449 = smul.addr %s1448, 512
        %s1450 = scalar_lea.vmem [#allocation2], %s1449
        // Predicated region
        $region41: #{tpu_custom_call.1} parent=39 // pred_check
          %p1451 = pneg %p184
        $region42: #{tpu_custom_call.1} parent=39 // pred_check_branch
          %1453 = sbr.rel (%p1451) target = $region44
        $region43: #{tpu_custom_call.1} parent=39 // pred_region
          %s1454 = smul.u32 8, %s21
          %s1455 = smul.addr %s1454, 2
          %s1456 = smul.addr %s20, 128
          %s1457 = sadd.s32 %s1455, %s1456
          %s1458 = smul.addr %s1457, 8
          %s1459 = scalar_lea.vmem %s5, %s1458
          // Predicated region
          $region45: #{tpu_custom_call.1} parent=43 // pred_check
            _
          $region46: #{tpu_custom_call.1} parent=43 // pred_check_branch
            %1461 = sbr.rel (0) target = $region48
          $region47: #{tpu_custom_call.1} parent=43 // pred_region
            // Predicated region
            $region49: #{tpu_custom_call.1} parent=47 // pred_check
              _
            $region50: #{tpu_custom_call.1} parent=47 // pred_check_branch
              %1463 = sbr.rel (0) target = $region52
            $region51: #{tpu_custom_call.1} parent=47 // pred_region
              // Predicated region
              $region64: #{tpu_custom_call.1} parent=51 // pred_check
                _
              $region65: #{tpu_custom_call.1} parent=51 // pred_check_branch
                %1605 = sbr.rel (0) target = $region67
              $region66: #{tpu_custom_call.1} parent=51 // pred_region
                loop: start=0, step=1, limit=1
                $region68: #{tpu_custom_call.1} parent=66 // loop_pre_header
                  _
                $region69: #{tpu_custom_call.1} parent=66 // loop_header
                  %s1607 = sphi 0, %s1611
                  %p1608 = scmp.ge.s32.totalorder %s1607, 1
                  %s1612 = sphi %s1450, %s1450
                  %s1613 = sphi %s1459, %s1459
                $region70: #{tpu_custom_call.1} parent=66 // loop_header_branch
                  %1610 = sbr.rel (%p1608) target = $region74
                $region71: #{tpu_custom_call.1} parent=66 // loop_body
                  %v1614 = vld [vmem:[%s1612] sm:$0xff]
                  %1615 = vst [vmem:[%s1613] sm:$0xff] %v1614
                  %v1616 = vld [vmem:[%s1612 + $0x8] sm:$0xff]
                  %1617 = vst [vmem:[%s1613 + $0x8] sm:$0xff] %v1616
                  %v1618 = vld [vmem:[%s1612 + $0x10] sm:$0xff]
                  %1619 = vst [vmem:[%s1613 + $0x10] sm:$0xff] %v1618
                  %v1620 = vld [vmem:[%s1612 + $0x18] sm:$0xff]
                  %1621 = vst [vmem:[%s1613 + $0x18] sm:$0xff] %v1620
                  %v1622 = vld [vmem:[%s1612 + $0x20] sm:$0xff]
                  %1623 = vst [vmem:[%s1613 + $0x20] sm:$0xff] %v1622
                  %v1624 = vld [vmem:[%s1612 + $0x28] sm:$0xff]
                  %1625 = vst [vmem:[%s1613 + $0x28] sm:$0xff] %v1624
                  %v1626 = vld [vmem:[%s1612 + $0x30] sm:$0xff]
                  %1627 = vst [vmem:[%s1613 + $0x30] sm:$0xff] %v1626
                  %v1628 = vld [vmem:[%s1612 + $0x38] sm:$0xff]
                  %1629 = vst [vmem:[%s1613 + $0x38] sm:$0xff] %v1628
                  %v1630 = vld [vmem:[%s1612 + $0x40] sm:$0xff]
                  %1631 = vst [vmem:[%s1613 + $0x40] sm:$0xff] %v1630
                  %v1632 = vld [vmem:[%s1612 + $0x48] sm:$0xff]
                  %1633 = vst [vmem:[%s1613 + $0x48] sm:$0xff] %v1632
                  %v1634 = vld [vmem:[%s1612 + $0x50] sm:$0xff]
                  %1635 = vst [vmem:[%s1613 + $0x50] sm:$0xff] %v1634
                  %v1636 = vld [vmem:[%s1612 + $0x58] sm:$0xff]
                  %1637 = vst [vmem:[%s1613 + $0x58] sm:$0xff] %v1636
                  %v1638 = vld [vmem:[%s1612 + $0x60] sm:$0xff]
                  %1639 = vst [vmem:[%s1613 + $0x60] sm:$0xff] %v1638
                  %v1640 = vld [vmem:[%s1612 + $0x68] sm:$0xff]
                  %1641 = vst [vmem:[%s1613 + $0x68] sm:$0xff] %v1640
                  %v1642 = vld [vmem:[%s1612 + $0x70] sm:$0xff]
                  %1643 = vst [vmem:[%s1613 + $0x70] sm:$0xff] %v1642
                  %v1644 = vld [vmem:[%s1612 + $0x78] sm:$0xff]
                  %1645 = vst [vmem:[%s1613 + $0x78] sm:$0xff] %v1644
                  %v1646 = vld [vmem:[%s1612 + $0x80] sm:$0xff]
                  %1647 = vst [vmem:[%s1613 + $0x100] sm:$0xff] %v1646
                  %v1648 = vld [vmem:[%s1612 + $0x88] sm:$0xff]
                  %1649 = vst [vmem:[%s1613 + $0x108] sm:$0xff] %v1648
                  %v1650 = vld [vmem:[%s1612 + $0x90] sm:$0xff]
                  %1651 = vst [vmem:[%s1613 + $0x110] sm:$0xff] %v1650
                  %v1652 = vld [vmem:[%s1612 + $0x98] sm:$0xff]
                  %1653 = vst [vmem:[%s1613 + $0x118] sm:$0xff] %v1652
                  %v1654 = vld [vmem:[%s1612 + $0xa0] sm:$0xff]
                  %1655 = vst [vmem:[%s1613 + $0x120] sm:$0xff] %v1654
                  %v1656 = vld [vmem:[%s1612 + $0xa8] sm:$0xff]
                  %1657 = vst [vmem:[%s1613 + $0x128] sm:$0xff] %v1656
                  %v1658 = vld [vmem:[%s1612 + $0xb0] sm:$0xff]
                  %1659 = vst [vmem:[%s1613 + $0x130] sm:$0xff] %v1658
                  %v1660 = vld [vmem:[%s1612 + $0xb8] sm:$0xff]
                  %1661 = vst [vmem:[%s1613 + $0x138] sm:$0xff] %v1660
                  %v1662 = vld [vmem:[%s1612 + $0xc0] sm:$0xff]
                  %1663 = vst [vmem:[%s1613 + $0x140] sm:$0xff] %v1662
                  %v1664 = vld [vmem:[%s1612 + $0xc8] sm:$0xff]
                  %1665 = vst [vmem:[%s1613 + $0x148] sm:$0xff] %v1664
                  %v1666 = vld [vmem:[%s1612 + $0xd0] sm:$0xff]
                  %1667 = vst [vmem:[%s1613 + $0x150] sm:$0xff] %v1666
                  %v1668 = vld [vmem:[%s1612 + $0xd8] sm:$0xff]
                  %1669 = vst [vmem:[%s1613 + $0x158] sm:$0xff] %v1668
                  %v1670 = vld [vmem:[%s1612 + $0xe0] sm:$0xff]
                  %1671 = vst [vmem:[%s1613 + $0x160] sm:$0xff] %v1670
                  %v1672 = vld [vmem:[%s1612 + $0xe8] sm:$0xff]
                  %1673 = vst [vmem:[%s1613 + $0x168] sm:$0xff] %v1672
                  %v1674 = vld [vmem:[%s1612 + $0xf0] sm:$0xff]
                  %1675 = vst [vmem:[%s1613 + $0x170] sm:$0xff] %v1674
                  %v1676 = vld [vmem:[%s1612 + $0xf8] sm:$0xff]
                  %1677 = vst [vmem:[%s1613 + $0x178] sm:$0xff] %v1676
                  %v1678 = vld [vmem:[%s1612 + $0x100] sm:$0xff]
                  %1679 = vst [vmem:[%s1613 + $0x200] sm:$0xff] %v1678
                  %v1680 = vld [vmem:[%s1612 + $0x108] sm:$0xff]
                  %1681 = vst [vmem:[%s1613 + $0x208] sm:$0xff] %v1680
                  %v1682 = vld [vmem:[%s1612 + $0x110] sm:$0xff]
                  %1683 = vst [vmem:[%s1613 + $0x210] sm:$0xff] %v1682
                  %v1684 = vld [vmem:[%s1612 + $0x118] sm:$0xff]
                  %1685 = vst [vmem:[%s1613 + $0x218] sm:$0xff] %v1684
                  %v1686 = vld [vmem:[%s1612 + $0x120] sm:$0xff]
                  %1687 = vst [vmem:[%s1613 + $0x220] sm:$0xff] %v1686
                  %v1688 = vld [vmem:[%s1612 + $0x128] sm:$0xff]
                  %1689 = vst [vmem:[%s1613 + $0x228] sm:$0xff] %v1688
                  %v1690 = vld [vmem:[%s1612 + $0x130] sm:$0xff]
                  %1691 = vst [vmem:[%s1613 + $0x230] sm:$0xff] %v1690
                  %v1692 = vld [vmem:[%s1612 + $0x138] sm:$0xff]
                  %1693 = vst [vmem:[%s1613 + $0x238] sm:$0xff] %v1692
                  %v1694 = vld [vmem:[%s1612 + $0x140] sm:$0xff]
                  %1695 = vst [vmem:[%s1613 + $0x240] sm:$0xff] %v1694
                  %v1696 = vld [vmem:[%s1612 + $0x148] sm:$0xff]
                  %1697 = vst [vmem:[%s1613 + $0x248] sm:$0xff] %v1696
                  %v1698 = vld [vmem:[%s1612 + $0x150] sm:$0xff]
                  %1699 = vst [vmem:[%s1613 + $0x250] sm:$0xff] %v1698
                  %v1700 = vld [vmem:[%s1612 + $0x158] sm:$0xff]
                  %1701 = vst [vmem:[%s1613 + $0x258] sm:$0xff] %v1700
                  %v1702 = vld [vmem:[%s1612 + $0x160] sm:$0xff]
                  %1703 = vst [vmem:[%s1613 + $0x260] sm:$0xff] %v1702
                  %v1704 = vld [vmem:[%s1612 + $0x168] sm:$0xff]
                  %1705 = vst [vmem:[%s1613 + $0x268] sm:$0xff] %v1704
                  %v1706 = vld [vmem:[%s1612 + $0x170] sm:$0xff]
                  %1707 = vst [vmem:[%s1613 + $0x270] sm:$0xff] %v1706
                  %v1708 = vld [vmem:[%s1612 + $0x178] sm:$0xff]
                  %1709 = vst [vmem:[%s1613 + $0x278] sm:$0xff] %v1708
                  %v1710 = vld [vmem:[%s1612 + $0x180] sm:$0xff]
                  %1711 = vst [vmem:[%s1613 + $0x300] sm:$0xff] %v1710
                  %v1712 = vld [vmem:[%s1612 + $0x188] sm:$0xff]
                  %1713 = vst [vmem:[%s1613 + $0x308] sm:$0xff] %v1712
                  %v1714 = vld [vmem:[%s1612 + $0x190] sm:$0xff]
                  %1715 = vst [vmem:[%s1613 + $0x310] sm:$0xff] %v1714
                  %v1716 = vld [vmem:[%s1612 + $0x198] sm:$0xff]
                  %1717 = vst [vmem:[%s1613 + $0x318] sm:$0xff] %v1716
                  %v1718 = vld [vmem:[%s1612 + $0x1a0] sm:$0xff]
                  %1719 = vst [vmem:[%s1613 + $0x320] sm:$0xff] %v1718
                  %v1720 = vld [vmem:[%s1612 + $0x1a8] sm:$0xff]
                  %1721 = vst [vmem:[%s1613 + $0x328] sm:$0xff] %v1720
                  %v1722 = vld [vmem:[%s1612 + $0x1b0] sm:$0xff]
                  %1723 = vst [vmem:[%s1613 + $0x330] sm:$0xff] %v1722
                  %v1724 = vld [vmem:[%s1612 + $0x1b8] sm:$0xff]
                  %1725 = vst [vmem:[%s1613 + $0x338] sm:$0xff] %v1724
                  %v1726 = vld [vmem:[%s1612 + $0x1c0] sm:$0xff]
                  %1727 = vst [vmem:[%s1613 + $0x340] sm:$0xff] %v1726
                  %v1728 = vld [vmem:[%s1612 + $0x1c8] sm:$0xff]
                  %1729 = vst [vmem:[%s1613 + $0x348] sm:$0xff] %v1728
                  %v1730 = vld [vmem:[%s1612 + $0x1d0] sm:$0xff]
                  %1731 = vst [vmem:[%s1613 + $0x350] sm:$0xff] %v1730
                  %v1732 = vld [vmem:[%s1612 + $0x1d8] sm:$0xff]
                  %1733 = vst [vmem:[%s1613 + $0x358] sm:$0xff] %v1732
                  %v1734 = vld [vmem:[%s1612 + $0x1e0] sm:$0xff]
                  %1735 = vst [vmem:[%s1613 + $0x360] sm:$0xff] %v1734
                  %v1736 = vld [vmem:[%s1612 + $0x1e8] sm:$0xff]
                  %1737 = vst [vmem:[%s1613 + $0x368] sm:$0xff] %v1736
                  %v1738 = vld [vmem:[%s1612 + $0x1f0] sm:$0xff]
                  %1739 = vst [vmem:[%s1613 + $0x370] sm:$0xff] %v1738
                  %v1740 = vld [vmem:[%s1612 + $0x1f8] sm:$0xff]
                  %1741 = vst [vmem:[%s1613 + $0x378] sm:$0xff] %v1740
                $region72: #{tpu_custom_call.1} parent=66 // loop_footer
                  %s1611 = sadd.s32 1, %s1607
                $region73: #{tpu_custom_call.1} parent=66 // loop_footer_branch
                  %1606 = sbr.rel target = $region69
                $region74: #{tpu_custom_call.1} parent=66 // loop_exit
                  _
              $region67: #{tpu_custom_call.1} parent=51 // pred_fallthru
                _
              // Predicated region
              $region75: #{tpu_custom_call.1} parent=51 // pred_check
                _
              $region76: #{tpu_custom_call.1} parent=51 // pred_check_branch
                %1743 = sbr.rel target = $region78
              $region77: #{tpu_custom_call.1} parent=51 // pred_region
                _
              $region78: #{tpu_custom_call.1} parent=51 // pred_fallthru
                _
            $region52: #{tpu_custom_call.1} parent=47 // pred_fallthru
              _
            // Predicated region
            $region53: #{tpu_custom_call.1} parent=47 // pred_check
              _
            $region54: #{tpu_custom_call.1} parent=47 // pred_check_branch
              %1465 = sbr.rel target = $region56
            $region55: #{tpu_custom_call.1} parent=47 // pred_region
              %s1467 = ssub.s32 256, 1
              loop: start=0, step=1, limit=1
              $region57: #{tpu_custom_call.1} parent=55 // loop_pre_header
                _
              $region58: #{tpu_custom_call.1} parent=55 // loop_header
                %s1469 = sphi 0, %s1473
                %p1470 = scmp.ge.s32.totalorder %s1469, 1
                %s1474 = sphi %s1450, %s1450
                %s1475 = sphi %s1459, %s1459
              $region59: #{tpu_custom_call.1} parent=55 // loop_header_branch
                %1472 = sbr.rel (%p1470) target = $region63
              $region60: #{tpu_custom_call.1} parent=55 // loop_body
                %v1476 = vld [vmem:[%s1474] sm:%s1467]
                %1477 = vst [vmem:[%s1475] sm:%s1467] %v1476
                %v1478 = vld [vmem:[%s1474 + $0x8] sm:%s1467]
                %1479 = vst [vmem:[%s1475 + $0x8] sm:%s1467] %v1478
                %v1480 = vld [vmem:[%s1474 + $0x10] sm:%s1467]
                %1481 = vst [vmem:[%s1475 + $0x10] sm:%s1467] %v1480
                %v1482 = vld [vmem:[%s1474 + $0x18] sm:%s1467]
                %1483 = vst [vmem:[%s1475 + $0x18] sm:%s1467] %v1482
                %v1484 = vld [vmem:[%s1474 + $0x20] sm:%s1467]
                %1485 = vst [vmem:[%s1475 + $0x20] sm:%s1467] %v1484
                %v1486 = vld [vmem:[%s1474 + $0x28] sm:%s1467]
                %1487 = vst [vmem:[%s1475 + $0x28] sm:%s1467] %v1486
                %v1488 = vld [vmem:[%s1474 + $0x30] sm:%s1467]
                %1489 = vst [vmem:[%s1475 + $0x30] sm:%s1467] %v1488
                %v1490 = vld [vmem:[%s1474 + $0x38] sm:%s1467]
                %1491 = vst [vmem:[%s1475 + $0x38] sm:%s1467] %v1490
                %v1492 = vld [vmem:[%s1474 + $0x40] sm:%s1467]
                %1493 = vst [vmem:[%s1475 + $0x40] sm:%s1467] %v1492
                %v1494 = vld [vmem:[%s1474 + $0x48] sm:%s1467]
                %1495 = vst [vmem:[%s1475 + $0x48] sm:%s1467] %v1494
                %v1496 = vld [vmem:[%s1474 + $0x50] sm:%s1467]
                %1497 = vst [vmem:[%s1475 + $0x50] sm:%s1467] %v1496
                %v1498 = vld [vmem:[%s1474 + $0x58] sm:%s1467]
                %1499 = vst [vmem:[%s1475 + $0x58] sm:%s1467] %v1498
                %v1500 = vld [vmem:[%s1474 + $0x60] sm:%s1467]
                %1501 = vst [vmem:[%s1475 + $0x60] sm:%s1467] %v1500
                %v1502 = vld [vmem:[%s1474 + $0x68] sm:%s1467]
                %1503 = vst [vmem:[%s1475 + $0x68] sm:%s1467] %v1502
                %v1504 = vld [vmem:[%s1474 + $0x70] sm:%s1467]
                %1505 = vst [vmem:[%s1475 + $0x70] sm:%s1467] %v1504
                %v1506 = vld [vmem:[%s1474 + $0x78] sm:%s1467]
                %1507 = vst [vmem:[%s1475 + $0x78] sm:%s1467] %v1506
                %v1508 = vld [vmem:[%s1474 + $0x80] sm:%s1467]
                %1509 = vst [vmem:[%s1475 + $0x100] sm:%s1467] %v1508
                %v1510 = vld [vmem:[%s1474 + $0x88] sm:%s1467]
                %1511 = vst [vmem:[%s1475 + $0x108] sm:%s1467] %v1510
                %v1512 = vld [vmem:[%s1474 + $0x90] sm:%s1467]
                %1513 = vst [vmem:[%s1475 + $0x110] sm:%s1467] %v1512
                %v1514 = vld [vmem:[%s1474 + $0x98] sm:%s1467]
                %1515 = vst [vmem:[%s1475 + $0x118] sm:%s1467] %v1514
                %v1516 = vld [vmem:[%s1474 + $0xa0] sm:%s1467]
                %1517 = vst [vmem:[%s1475 + $0x120] sm:%s1467] %v1516
                %v1518 = vld [vmem:[%s1474 + $0xa8] sm:%s1467]
                %1519 = vst [vmem:[%s1475 + $0x128] sm:%s1467] %v1518
                %v1520 = vld [vmem:[%s1474 + $0xb0] sm:%s1467]
                %1521 = vst [vmem:[%s1475 + $0x130] sm:%s1467] %v1520
                %v1522 = vld [vmem:[%s1474 + $0xb8] sm:%s1467]
                %1523 = vst [vmem:[%s1475 + $0x138] sm:%s1467] %v1522
                %v1524 = vld [vmem:[%s1474 + $0xc0] sm:%s1467]
                %1525 = vst [vmem:[%s1475 + $0x140] sm:%s1467] %v1524
                %v1526 = vld [vmem:[%s1474 + $0xc8] sm:%s1467]
                %1527 = vst [vmem:[%s1475 + $0x148] sm:%s1467] %v1526
                %v1528 = vld [vmem:[%s1474 + $0xd0] sm:%s1467]
                %1529 = vst [vmem:[%s1475 + $0x150] sm:%s1467] %v1528
                %v1530 = vld [vmem:[%s1474 + $0xd8] sm:%s1467]
                %1531 = vst [vmem:[%s1475 + $0x158] sm:%s1467] %v1530
                %v1532 = vld [vmem:[%s1474 + $0xe0] sm:%s1467]
                %1533 = vst [vmem:[%s1475 + $0x160] sm:%s1467] %v1532
                %v1534 = vld [vmem:[%s1474 + $0xe8] sm:%s1467]
                %1535 = vst [vmem:[%s1475 + $0x168] sm:%s1467] %v1534
                %v1536 = vld [vmem:[%s1474 + $0xf0] sm:%s1467]
                %1537 = vst [vmem:[%s1475 + $0x170] sm:%s1467] %v1536
                %v1538 = vld [vmem:[%s1474 + $0xf8] sm:%s1467]
                %1539 = vst [vmem:[%s1475 + $0x178] sm:%s1467] %v1538
                %v1540 = vld [vmem:[%s1474 + $0x100] sm:%s1467]
                %1541 = vst [vmem:[%s1475 + $0x200] sm:%s1467] %v1540
                %v1542 = vld [vmem:[%s1474 + $0x108] sm:%s1467]
                %1543 = vst [vmem:[%s1475 + $0x208] sm:%s1467] %v1542
                %v1544 = vld [vmem:[%s1474 + $0x110] sm:%s1467]
                %1545 = vst [vmem:[%s1475 + $0x210] sm:%s1467] %v1544
                %v1546 = vld [vmem:[%s1474 + $0x118] sm:%s1467]
                %1547 = vst [vmem:[%s1475 + $0x218] sm:%s1467] %v1546
                %v1548 = vld [vmem:[%s1474 + $0x120] sm:%s1467]
                %1549 = vst [vmem:[%s1475 + $0x220] sm:%s1467] %v1548
                %v1550 = vld [vmem:[%s1474 + $0x128] sm:%s1467]
                %1551 = vst [vmem:[%s1475 + $0x228] sm:%s1467] %v1550
                %v1552 = vld [vmem:[%s1474 + $0x130] sm:%s1467]
                %1553 = vst [vmem:[%s1475 + $0x230] sm:%s1467] %v1552
                %v1554 = vld [vmem:[%s1474 + $0x138] sm:%s1467]
                %1555 = vst [vmem:[%s1475 + $0x238] sm:%s1467] %v1554
                %v1556 = vld [vmem:[%s1474 + $0x140] sm:%s1467]
                %1557 = vst [vmem:[%s1475 + $0x240] sm:%s1467] %v1556
                %v1558 = vld [vmem:[%s1474 + $0x148] sm:%s1467]
                %1559 = vst [vmem:[%s1475 + $0x248] sm:%s1467] %v1558
                %v1560 = vld [vmem:[%s1474 + $0x150] sm:%s1467]
                %1561 = vst [vmem:[%s1475 + $0x250] sm:%s1467] %v1560
                %v1562 = vld [vmem:[%s1474 + $0x158] sm:%s1467]
                %1563 = vst [vmem:[%s1475 + $0x258] sm:%s1467] %v1562
                %v1564 = vld [vmem:[%s1474 + $0x160] sm:%s1467]
                %1565 = vst [vmem:[%s1475 + $0x260] sm:%s1467] %v1564
                %v1566 = vld [vmem:[%s1474 + $0x168] sm:%s1467]
                %1567 = vst [vmem:[%s1475 + $0x268] sm:%s1467] %v1566
                %v1568 = vld [vmem:[%s1474 + $0x170] sm:%s1467]
                %1569 = vst [vmem:[%s1475 + $0x270] sm:%s1467] %v1568
                %v1570 = vld [vmem:[%s1474 + $0x178] sm:%s1467]
                %1571 = vst [vmem:[%s1475 + $0x278] sm:%s1467] %v1570
                %v1572 = vld [vmem:[%s1474 + $0x180] sm:%s1467]
                %1573 = vst [vmem:[%s1475 + $0x300] sm:%s1467] %v1572
                %v1574 = vld [vmem:[%s1474 + $0x188] sm:%s1467]
                %1575 = vst [vmem:[%s1475 + $0x308] sm:%s1467] %v1574
                %v1576 = vld [vmem:[%s1474 + $0x190] sm:%s1467]
                %1577 = vst [vmem:[%s1475 + $0x310] sm:%s1467] %v1576
                %v1578 = vld [vmem:[%s1474 + $0x198] sm:%s1467]
                %1579 = vst [vmem:[%s1475 + $0x318] sm:%s1467] %v1578
                %v1580 = vld [vmem:[%s1474 + $0x1a0] sm:%s1467]
                %1581 = vst [vmem:[%s1475 + $0x320] sm:%s1467] %v1580
                %v1582 = vld [vmem:[%s1474 + $0x1a8] sm:%s1467]
                %1583 = vst [vmem:[%s1475 + $0x328] sm:%s1467] %v1582
                %v1584 = vld [vmem:[%s1474 + $0x1b0] sm:%s1467]
                %1585 = vst [vmem:[%s1475 + $0x330] sm:%s1467] %v1584
                %v1586 = vld [vmem:[%s1474 + $0x1b8] sm:%s1467]
                %1587 = vst [vmem:[%s1475 + $0x338] sm:%s1467] %v1586
                %v1588 = vld [vmem:[%s1474 + $0x1c0] sm:%s1467]
                %1589 = vst [vmem:[%s1475 + $0x340] sm:%s1467] %v1588
                %v1590 = vld [vmem:[%s1474 + $0x1c8] sm:%s1467]
                %1591 = vst [vmem:[%s1475 + $0x348] sm:%s1467] %v1590
                %v1592 = vld [vmem:[%s1474 + $0x1d0] sm:%s1467]
                %1593 = vst [vmem:[%s1475 + $0x350] sm:%s1467] %v1592
                %v1594 = vld [vmem:[%s1474 + $0x1d8] sm:%s1467]
                %1595 = vst [vmem:[%s1475 + $0x358] sm:%s1467] %v1594
                %v1596 = vld [vmem:[%s1474 + $0x1e0] sm:%s1467]
                %1597 = vst [vmem:[%s1475 + $0x360] sm:%s1467] %v1596
                %v1598 = vld [vmem:[%s1474 + $0x1e8] sm:%s1467]
                %1599 = vst [vmem:[%s1475 + $0x368] sm:%s1467] %v1598
                %v1600 = vld [vmem:[%s1474 + $0x1f0] sm:%s1467]
                %1601 = vst [vmem:[%s1475 + $0x370] sm:%s1467] %v1600
                %v1602 = vld [vmem:[%s1474 + $0x1f8] sm:%s1467]
                %1603 = vst [vmem:[%s1475 + $0x378] sm:%s1467] %v1602
              $region61: #{tpu_custom_call.1} parent=55 // loop_footer
                %s1473 = sadd.s32 1, %s1469
              $region62: #{tpu_custom_call.1} parent=55 // loop_footer_branch
                %1468 = sbr.rel target = $region58
              $region63: #{tpu_custom_call.1} parent=55 // loop_exit
                _
            $region56: #{tpu_custom_call.1} parent=47 // pred_fallthru
              _
          $region48: #{tpu_custom_call.1} parent=43 // pred_fallthru
            _
          %1744 = vnop
        $region44: #{tpu_custom_call.1} parent=39 // pred_fallthru
          _
      $region40: #{tpu_custom_call.1} parent=5 // pred_fallthru
        _
      %p1745 = scmp.le.s32.totalorder 2, %s11
      // Predicated region
      $region79: #{tpu_custom_call.1} parent=5 // pred_check
        %p1746 = pneg %p1745
      $region80: #{tpu_custom_call.1} parent=5 // pred_check_branch
        %1748 = sbr.rel (%p1746) target = $region82
      $region81: #{tpu_custom_call.1} parent=5 // pred_region
        %s1749 = ssub.s32 %s11, 2
        // Predicated region
        $region83: #{tpu_custom_call.1} parent=81 // pred_check
          %p1750 = pneg %p190
        $region84: #{tpu_custom_call.1} parent=81 // pred_check_branch
          %1752 = sbr.rel (%p1750) target = $region86
        $region85: #{tpu_custom_call.1} parent=81 // pred_region
          %s1753 = sand.u32 %s175, 1
          %s1754 = sand.u32 %s175, 1
          %s1755 = smul.addr %s1754, 512
          %s1756 = scalar_lea.vmem [#allocation2], %s1755
        $region86: #{tpu_custom_call.1} parent=81 // pred_fallthru
          _
      $region82: #{tpu_custom_call.1} parent=5 // pred_fallthru
        _
    $region6: #{tpu_custom_call.1} parent=1 // loop_footer
      %s15 = sadd.s32 1, %s11
    $region7: #{tpu_custom_call.1} parent=1 // loop_footer_branch
      %10 = sbr.rel target = $region3
    $region8: #{tpu_custom_call.1} parent=1 // loop_exit
      _

</llo_original>
